<compile_context>
chip_gen: v6e
topology: v6e:2x2x1
jax: 0.10.0
libtpu: 0.0.40
codegen_flags: <defaults>
</compile_context>

<pallas_src>
import functools
import math

import jax
import jax.numpy as jnp
from jax.experimental import pallas as pl
from jax.experimental.pallas import tpu as pltpu


# ---------------------------------------------------------------------------
# Tiling helper
# ---------------------------------------------------------------------------
def _choose_tm(m, k):
    """M-tile: large tiles amortize per-grid-step overhead (mem-bound layers);
    cap at 256 when K is large so the resident weight + tiles fit v7x VMEM."""
    cap = 256 if k >= 2048 else 512
    tm = min(cap, m)
    if tm % 8 != 0:
        tm = m  # single block; block dim == full array dim is always legal
    return tm


# ---------------------------------------------------------------------------
# Pallas kernels
# ---------------------------------------------------------------------------
def _mm_bias_act_kernel(x_ref, w_ref, b_ref, o_ref, *, act):
    """One M-tile of patches @ W + bias with fused activation."""
    y = jnp.dot(x_ref[...], w_ref[...], preferred_element_type=jnp.float32)
    y = y + b_ref[...]                       # bias [1, N] f32, broadcasts
    if act == "lrelu":
        y = jnp.where(y > 0, y, 0.2 * y)
    elif act == "sigmoid":
        y = jax.nn.sigmoid(y)
    o_ref[...] = y.astype(o_ref.dtype)


def _mm_bn_stats_kernel(x_ref, w_ref, y_ref, s_ref, ss_ref, *, tm, m_total):
    """Matmul (no bias) + fused per-channel sum / sumsq accumulation.

    s_ref / ss_ref are resident (1, N) accumulators across the (arbitrary) M axis.
    Rows past m_total (ragged last tile) are masked out of the statistics; Pallas
    discards their y writes automatically.
    """
    i = pl.program_id(0)

    @pl.when(i == 0)
    def _():
        s_ref[...] = jnp.zeros_like(s_ref)
        ss_ref[...] = jnp.zeros_like(ss_ref)

    y = jnp.dot(x_ref[...], w_ref[...], preferred_element_type=jnp.float32)
    y_ref[...] = y.astype(y_ref.dtype)

    row = i * tm + jax.lax.broadcasted_iota(jnp.int32, (tm, 1), 0)
    ym = jnp.where(row < m_total, y, 0.0)
    s_ref[...] += jnp.sum(ym, axis=0, keepdims=True)
    ss_ref[...] += jnp.sum(ym * ym, axis=0, keepdims=True)


def _scale_shift_lrelu_kernel(y_ref, sc_ref, sh_ref, o_ref):
    """BatchNorm normalize (precomputed per-channel scale/shift) + LeakyReLU(0.2)."""
    y = y_ref[...].astype(jnp.float32)
    z = y * sc_ref[...] + sh_ref[...]
    o_ref[...] = jnp.where(z > 0, z, 0.2 * z).astype(o_ref.dtype)


def _self_attn_kernel(x_ref, wq_ref, bq_ref, wk_ref, bk_ref, wv_ref, bv_ref,
                      g_ref, o_ref):
    """Fused SAGAN self-attention for one batch element (x: [L, C])."""
    x = x_ref[0]                                                     # [L, C] bf16
    q = jnp.dot(x, wq_ref[...], preferred_element_type=jnp.float32) + bq_ref[...]
    k = jnp.dot(x, wk_ref[...], preferred_element_type=jnp.float32) + bk_ref[...]
    v = jnp.dot(x, wv_ref[...], preferred_element_type=jnp.float32) + bv_ref[...]

    # energy[i, j] = q_i . k_j   (no sqrt(d) scaling in SAGAN)
    e = jax.lax.dot_general(q.astype(jnp.bfloat16), k.astype(jnp.bfloat16),
                            (((1,), (1,)), ((), ())),
                            preferred_element_type=jnp.float32)      # [L, L]
    e = e - jnp.max(e, axis=-1, keepdims=True)
    p = jnp.exp(e)
    p = p * pl.reciprocal(jnp.sum(p, axis=-1, keepdims=True), approx=True)

    out = jnp.dot(p.astype(jnp.bfloat16), v.astype(jnp.bfloat16),
                  preferred_element_type=jnp.float32)                # [L, C]
    g = g_ref[0, 0]
    o_ref[0] = (g * out + x.astype(jnp.float32)).astype(o_ref.dtype)


# ---------------------------------------------------------------------------
# pallas_call wrappers
# ---------------------------------------------------------------------------
def matmul_bias_act(x, w, b, act):
    """x:[M,K] @ w:[K,N] + b, fused activation. bf16 operands, bf16 output."""
    M, K = x.shape
    _, N = w.shape
    tm = _choose_tm(M, K)
    return pl.pallas_call(
        functools.partial(_mm_bias_act_kernel, act=act),
        out_shape=jax.ShapeDtypeStruct((M, N), jnp.bfloat16),
        grid=(pl.cdiv(M, tm),),
        in_specs=[
            pl.BlockSpec((tm, K), lambda i: (i, 0)),
            pl.BlockSpec((K, N), lambda i: (0, 0)),
            pl.BlockSpec((1, N), lambda i: (0, 0)),
        ],
        out_specs=pl.BlockSpec((tm, N), lambda i: (i, 0)),
        compiler_params=pltpu.CompilerParams(dimension_semantics=("parallel",)),
    )(x.astype(jnp.bfloat16), w.astype(jnp.bfloat16),
      b.reshape(1, N).astype(jnp.float32))


def matmul_bn_stats(x, w):
    """x @ w (no bias) plus fused per-channel sum / sumsq for BatchNorm."""
    M, K = x.shape
    _, N = w.shape
    tm = _choose_tm(M, K)
    return pl.pallas_call(
        functools.partial(_mm_bn_stats_kernel, tm=tm, m_total=M),
        out_shape=(
            jax.ShapeDtypeStruct((M, N), jnp.bfloat16),
            jax.ShapeDtypeStruct((1, N), jnp.float32),
            jax.ShapeDtypeStruct((1, N), jnp.float32),
        ),
        grid=(pl.cdiv(M, tm),),
        in_specs=[
            pl.BlockSpec((tm, K), lambda i: (i, 0)),
            pl.BlockSpec((K, N), lambda i: (0, 0)),
        ],
        out_specs=(
            pl.BlockSpec((tm, N), lambda i: (i, 0)),
            pl.BlockSpec((1, N), lambda i: (0, 0)),   # resident accumulators
            pl.BlockSpec((1, N), lambda i: (0, 0)),
        ),
        compiler_params=pltpu.CompilerParams(dimension_semantics=("arbitrary",)),
    )(x.astype(jnp.bfloat16), w.astype(jnp.bfloat16))


def scale_shift_lrelu(y, scale, shift):
    """Tiled, lane-parallel BatchNorm normalize + LeakyReLU."""
    M, C = y.shape
    tm = _choose_tm(M, C)
    return pl.pallas_call(
        _scale_shift_lrelu_kernel,
        out_shape=jax.ShapeDtypeStruct((M, C), jnp.bfloat16),
        grid=(pl.cdiv(M, tm),),
        in_specs=[
            pl.BlockSpec((tm, C), lambda i: (i, 0)),
            pl.BlockSpec((1, C), lambda i: (0, 0)),
            pl.BlockSpec((1, C), lambda i: (0, 0)),
        ],
        out_specs=pl.BlockSpec((tm, C), lambda i: (i, 0)),
        compiler_params=pltpu.CompilerParams(dimension_semantics=("parallel",)),
    )(y, scale.astype(jnp.float32), shift.astype(jnp.float32))


def self_attention(x_blc, p):
    """x_blc: [B, L, C]; fused attention per batch element."""
    B, L, C = x_blc.shape
    C8 = p["wq"].shape[1]
    return pl.pallas_call(
        _self_attn_kernel,
        out_shape=jax.ShapeDtypeStruct((B, L, C), jnp.bfloat16),
        grid=(B,),
        in_specs=[
            pl.BlockSpec((1, L, C), lambda b: (b, 0, 0)),
            pl.BlockSpec((C, C8), lambda b: (0, 0)),
            pl.BlockSpec((1, C8), lambda b: (0, 0)),
            pl.BlockSpec((C, C8), lambda b: (0, 0)),
            pl.BlockSpec((1, C8), lambda b: (0, 0)),
            pl.BlockSpec((C, C), lambda b: (0, 0)),
            pl.BlockSpec((1, C), lambda b: (0, 0)),
            pl.BlockSpec((1, 1), lambda b: (0, 0)),
        ],
        out_specs=pl.BlockSpec((1, L, C), lambda b: (b, 0, 0)),
        compiler_params=pltpu.CompilerParams(dimension_semantics=("parallel",)),
    )(x_blc.astype(jnp.bfloat16),
      p["wq"].astype(jnp.bfloat16), p["bq"].reshape(1, C8).astype(jnp.float32),
      p["wk"].astype(jnp.bfloat16), p["bk"].reshape(1, C8).astype(jnp.float32),
      p["wv"].astype(jnp.bfloat16), p["bv"].reshape(1, C).astype(jnp.float32),
      p["gamma"].reshape(1, 1).astype(jnp.float32))


# ---------------------------------------------------------------------------
# Plain-JAX glue
# ---------------------------------------------------------------------------
def im2col(x_nhwc, kh, kw, stride, pad):
    """Return (patches [N*OH*OW, kh*kw*C] in x's dtype (bf16), (N, OH, OW))."""
    # TODO(synk): fuse patch extraction into the matmul kernel (memory_space=pl.ANY +
    # strided make_async_copy) to remove the 16x im2col HBM expansion entirely.
    N, H, W, C = x_nhwc.shape
    if pad > 0:
        x_nhwc = jnp.pad(x_nhwc, ((0, 0), (pad, pad), (pad, pad), (0, 0)))
    OH = (H + 2 * pad - kh) // stride + 1
    OW = (W + 2 * pad - kw) // stride + 1
    cols = []
    for i in range(kh):
        for j in range(kw):
            cols.append(x_nhwc[:, i:i + (OH - 1) * stride + 1:stride,
                               j:j + (OW - 1) * stride + 1:stride, :])
    patches = jnp.stack(cols, axis=3)              # [N, OH, OW, kh*kw, C]
    return patches.reshape(N * OH * OW, kh * kw * C), (N, OH, OW)


def _l2_normalize(v, eps=1e-12):
    return v / (jnp.linalg.norm(v) + eps)


def spectral_normalize(w_kc, u):
    """One power iteration on W viewed as [Cout, K] (torch spectral_norm, train step)."""
    # TODO(synk): torch also persists the updated u buffer; here u is a fixed input.
    w_mat = w_kc.T                                  # [Cout, K]
    v = _l2_normalize(w_mat.T @ u)
    u_new = _l2_normalize(w_mat @ v)
    sigma = jnp.dot(u_new, w_mat @ v)
    return w_kc / sigma


# ---------------------------------------------------------------------------
# Model: layer plan, parameters, forward
# ---------------------------------------------------------------------------
def _layer_plan(nc, ndf):
    """Mirror of the PyTorch __init__ loop."""
    repeat_num = int(math.log2(ndf)) - 3
    plan = [("conv_in", nc, ndf)]
    mult = 1
    while mult < 2 ** repeat_num:
        cin, cout = ndf * mult, ndf * mult * 2
        attn = mult > (2 ** (repeat_num - 1)) // 4
        plan.append(("conv_bn", cin, cout, attn))
        mult *= 2
    plan.append(("conv_out", ndf * mult, 1))
    return plan


def init_params(key, nc=3, ndf=16):
    """Weights stored in im2col layout [kh*kw*Cin, Cout] (== torch conv weight
    transposed (2,3,1,0) + reshaped). N(0, 0.02) init; biases zero; BN gamma=1,
    beta=0; attention gamma=0 (as in the module)."""
    plan = _layer_plan(nc, ndf)
    keys = iter(jax.random.split(key, 64))
    nrm = lambda k, s: 0.02 * jax.random.normal(k, s, dtype=jnp.float32)
    params = {}
    for li, blk in enumerate(plan):
        kind = blk[0]
        if kind == "conv_in":
            _, cin, cout = blk
            params[f"l{li}"] = dict(
                w=nrm(next(keys), (16 * cin, cout)),
                b=jnp.zeros((cout,), jnp.float32),
                u=_l2_normalize(jax.random.normal(next(keys), (cout,), jnp.float32)),
            )
        elif kind == "conv_bn":
            _, cin, cout, attn = blk
            d = dict(
                w=nrm(next(keys), (16 * cin, cout)),
                u=_l2_normalize(jax.random.normal(next(keys), (cout,), jnp.float32)),
                bn_gamma=jnp.ones((cout,), jnp.float32),
                bn_beta=jnp.zeros((cout,), jnp.float32),
            )
            if attn:
                c8 = cout // 8
                d.update(
                    wq=nrm(next(keys), (cout, c8)), bq=jnp.zeros((c8,), jnp.float32),
                    wk=nrm(next(keys), (cout, c8)), bk=jnp.zeros((c8,), jnp.float32),
                    wv=nrm(next(keys), (cout, cout)), bv=jnp.zeros((cout,), jnp.float32),
                    gamma=jnp.zeros((1,), jnp.float32),
                )
            params[f"l{li}"] = d
        else:  # conv_out
            _, cin, _ = blk
            params[f"l{li}"] = dict(w=nrm(next(keys), (16 * cin, 1)))
    return params


def discriminator_forward(x_nchw, params, nc=3, ndf=16):
    plan = _layer_plan(nc, ndf)
    x = jnp.transpose(x_nchw, (0, 2, 3, 1)).astype(jnp.bfloat16)   # NHWC, bf16

    out = None
    for li, blk in enumerate(plan):
        p_l = params[f"l{li}"]
        kind = blk[0]
        if kind == "conv_in":
            cout = blk[2]
            w = spectral_normalize(p_l["w"], p_l["u"])
            patches, (n, oh, ow) = im2col(x, 4, 4, 2, 1)
            y = matmul_bias_act(patches, w, p_l["b"], act="lrelu")
            x = y.reshape(n, oh, ow, cout)
        elif kind == "conv_bn":
            _, _, cout, attn = blk
            w = spectral_normalize(p_l["w"], p_l["u"])
            patches, (n, oh, ow) = im2col(x, 4, 4, 2, 1)
            y, s, ss = matmul_bn_stats(patches, w)
            m = y.shape[0]
            # training-mode BatchNorm: biased batch statistics + affine
            mean = s[0] / m
            var = jnp.maximum(ss[0] / m - mean * mean, 0.0)
            inv = jax.lax.rsqrt(var + 1e-5)
            scale = (p_l["bn_gamma"] * inv).reshape(1, cout)
            shift = (p_l["bn_beta"] - mean * p_l["bn_gamma"] * inv).reshape(1, cout)
            y = scale_shift_lrelu(y, scale, shift)
            if attn:
                y = self_attention(y.reshape(n, oh * ow, cout), p_l)
            x = y.reshape(n, oh, ow, cout)
        else:  # conv_out: 4x4 valid conv, Cout=1, + sigmoid
            # Per perf review: N=1 output leaves the MXU idle -> plain JAX is cheaper
            # than a pallas_call here (M = batch, fully masked 1-wide stores otherwise).
            patches, (n, oh, ow) = im2col(x, 4, 4, 1, 0)
            logits = jnp.dot(patches.astype(jnp.float32), p_l["w"])
            out = jax.nn.sigmoid(logits).reshape(n, oh, ow, 1)

    return jnp.transpose(out, (0, 3, 1, 2))        # NCHW, [N, 1, 1, 1]


# ---------------------------------------------------------------------------
if __name__ == "__main__":
    # ndf=16 -> one (SN-conv + BN + LeakyReLU + SelfAttn) block; 16x16 input gives
    # the 4x4 feature map the final valid 4x4 conv requires.
    NC, NDF, BATCH, SIZE = 3, 16, 2, 16

    key = jax.random.PRNGKey(0)
    pkey, xkey = jax.random.split(key)
    params = init_params(pkey, nc=NC, ndf=NDF)
    x = jax.random.normal(xkey, (BATCH, NC, SIZE, SIZE), dtype=jnp.float32)

    fwd = jax.jit(functools.partial(discriminator_forward, nc=NC, ndf=NDF))
    out = fwd(x, params)
    jax.block_until_ready(out)

    assert out.shape == (BATCH, 1, 1, 1), out.shape
    assert bool(jnp.all(jnp.isfinite(out)))
    assert bool(jnp.all((out >= 0.0) & (out <= 1.0)))
    print("KERNEL_OK")
</pallas_src>

<mosaic_0001>
module attributes {stable_mosaic.version = 11 : i64} {
  func.func @_mm_bias_act_kernel(%arg0: i32, %arg1: memref<128x48xbf16, #tpu.memory_space<vmem>>, %arg2: memref<48x16xbf16, #tpu.memory_space<vmem>>, %arg3: memref<1x16xf32, #tpu.memory_space<vmem>>, %arg4: memref<128x16xbf16, #tpu.memory_space<vmem>>) attributes {dimension_semantics = [#tpu.dimension_semantics<parallel>], iteration_bounds = array<i64: 1>, scalar_prefetch = 0 : i64, scratch_operands = 0 : i64, tpu.core_type = #tpu.core_type<tc>, window_params = [{transform_indices = @transform_0, window_bounds = array<i64: 128, 48>}, {pipeline_mode = #tpu.pipeline_mode<synchronous>, transform_indices = @transform_1, window_bounds = array<i64: 48, 16>}, {pipeline_mode = #tpu.pipeline_mode<synchronous>, transform_indices = @transform_2, window_bounds = array<i64: 1, 16>}, {transform_indices = @transform_3, window_bounds = array<i64: 128, 16>}]} {
    %c0 = arith.constant 0 : index
    %c0_0 = arith.constant 0 : index
    %0 = vector.load %arg1[%c0, %c0_0] : memref<128x48xbf16, #tpu.memory_space<vmem>>, vector<128x48xbf16>
    %c0_1 = arith.constant 0 : index
    %c0_2 = arith.constant 0 : index
    %1 = vector.load %arg2[%c0_1, %c0_2] : memref<48x16xbf16, #tpu.memory_space<vmem>>, vector<48x16xbf16>
    %cst = arith.constant dense<0.000000e+00> : vector<128x16xf32>
    %2 = tpu.matmul %0, %1, %cst {dimension_numbers = #tpu.dot_dimension_numbers<[1], [0], [0], [1], [0, 0, 1, 1], [], []>} : vector<128x48xbf16>, vector<48x16xbf16>, vector<128x16xf32> -> vector<128x16xf32>
    %c0_3 = arith.constant 0 : index
    %c0_4 = arith.constant 0 : index
    %3 = vector.load %arg3[%c0_3, %c0_4] : memref<1x16xf32, #tpu.memory_space<vmem>>, vector<1x16xf32>
    %4 = vector.broadcast %3 : vector<1x16xf32> to vector<128x16xf32>
    %5 = arith.addf %2, %4 : vector<128x16xf32>
    %cst_5 = arith.constant 0.000000e+00 : f32
    %6 = vector.broadcast %cst_5 : f32 to vector<128x16xf32>
    %7 = arith.cmpf ogt, %5, %6 : vector<128x16xf32>
    %cst_6 = arith.constant 2.000000e-01 : f32
    %8 = vector.broadcast %cst_6 : f32 to vector<128x16xf32>
    %9 = arith.mulf %8, %5 : vector<128x16xf32>
    %10 = arith.select %7, %5, %9 : vector<128x16xi1>, vector<128x16xf32>
    %11 = arith.truncf %10 : vector<128x16xf32> to vector<128x16xbf16>
    %c0_7 = arith.constant 0 : index
    %c0_8 = arith.constant 0 : index
    %12 = vector.load %arg4[%c0_7, %c0_8] : memref<128x16xbf16, #tpu.memory_space<vmem>>, vector<128x16xbf16>
    tpu.vector_store %arg4[%c0_7, %c0_8], %11 {strides = array<i32>} : memref<128x16xbf16, #tpu.memory_space<vmem>>, vector<128x16xbf16>,
    return
  }
  func.func @transform_0(%arg0: i32) -> (i32, i32) {
    %c0_i32 = arith.constant 0 : i32
    %c0_i32_0 = arith.constant 0 : i32
    return %arg0, %c0_i32 : i32, i32
  }
  func.func @transform_1(%arg0: i32) -> (i32, i32) {
    %c0_i32 = arith.constant 0 : i32
    %c0_i32_0 = arith.constant 0 : i32
    %c0_i32_1 = arith.constant 0 : i32
    return %c0_i32, %c0_i32_0 : i32, i32
  }
  func.func @transform_2(%arg0: i32) -> (i32, i32) {
    %c0_i32 = arith.constant 0 : i32
    %c0_i32_0 = arith.constant 0 : i32
    %c0_i32_1 = arith.constant 0 : i32
    return %c0_i32, %c0_i32_0 : i32, i32
  }
  func.func @transform_3(%arg0: i32) -> (i32, i32) {
    %c0_i32 = arith.constant 0 : i32
    %c0_i32_0 = arith.constant 0 : i32
    return %arg0, %c0_i32 : i32, i32
  }
}

module attributes {stable_mosaic.version = 11 : i64} {
  func.func @_scale_shift_lrelu_kernel(%arg0: i32, %arg1: memref<32x32xbf16, #tpu.memory_space<vmem>>, %arg2: memref<1x32xf32, #tpu.memory_space<vmem>>, %arg3: memref<1x32xf32, #tpu.memory_space<vmem>>, %arg4: memref<32x32xbf16, #tpu.memory_space<vmem>>) attributes {dimension_semantics = [#tpu.dimension_semantics<parallel>], iteration_bounds = array<i64: 1>, scalar_prefetch = 0 : i64, scratch_operands = 0 : i64, tpu.core_type = #tpu.core_type<tc>, window_params = [{transform_indices = @transform_0, window_bounds = array<i64: 32, 32>}, {pipeline_mode = #tpu.pipeline_mode<synchronous>, transform_indices = @transform_1, window_bounds = array<i64: 1, 32>}, {pipeline_mode = #tpu.pipeline_mode<synchronous>, transform_indices = @transform_2, window_bounds = array<i64: 1, 32>}, {transform_indices = @transform_3, window_bounds = array<i64: 32, 32>}]} {
    %c0 = arith.constant 0 : index
    %c0_0 = arith.constant 0 : index
    %0 = vector.load %arg1[%c0, %c0_0] : memref<32x32xbf16, #tpu.memory_space<vmem>>, vector<32x32xbf16>
    %1 = arith.extf %0 : vector<32x32xbf16> to vector<32x32xf32>
    %c0_1 = arith.constant 0 : index
    %c0_2 = arith.constant 0 : index
    %2 = vector.load %arg2[%c0_1, %c0_2] : memref<1x32xf32, #tpu.memory_space<vmem>>, vector<1x32xf32>
    %3 = vector.broadcast %2 : vector<1x32xf32> to vector<32x32xf32>
    %4 = arith.mulf %1, %3 : vector<32x32xf32>
    %c0_3 = arith.constant 0 : index
    %c0_4 = arith.constant 0 : index
    %5 = vector.load %arg3[%c0_3, %c0_4] : memref<1x32xf32, #tpu.memory_space<vmem>>, vector<1x32xf32>
    %6 = vector.broadcast %5 : vector<1x32xf32> to vector<32x32xf32>
    %7 = arith.addf %4, %6 : vector<32x32xf32>
    %cst = arith.constant 0.000000e+00 : f32
    %8 = vector.broadcast %cst : f32 to vector<32x32xf32>
    %9 = arith.cmpf ogt, %7, %8 : vector<32x32xf32>
    %cst_5 = arith.constant 2.000000e-01 : f32
    %10 = vector.broadcast %cst_5 : f32 to vector<32x32xf32>
    %11 = arith.mulf %10, %7 : vector<32x32xf32>
    %12 = arith.select %9, %7, %11 : vector<32x32xi1>, vector<32x32xf32>
    %13 = arith.truncf %12 : vector<32x32xf32> to vector<32x32xbf16>
    %c0_6 = arith.constant 0 : index
    %c0_7 = arith.constant 0 : index
    %14 = vector.load %arg4[%c0_6, %c0_7] : memref<32x32xbf16, #tpu.memory_space<vmem>>, vector<32x32xbf16>
    tpu.vector_store %arg4[%c0_6, %c0_7], %13 {strides = array<i32>} : memref<32x32xbf16, #tpu.memory_space<vmem>>, vector<32x32xbf16>,
    return
  }
  func.func @transform_0(%arg0: i32) -> (i32, i32) {
    %c0_i32 = arith.constant 0 : i32
    %c0_i32_0 = arith.constant 0 : i32
    return %arg0, %c0_i32 : i32, i32
  }
  func.func @transform_1(%arg0: i32) -> (i32, i32) {
    %c0_i32 = arith.constant 0 : i32
    %c0_i32_0 = arith.constant 0 : i32
    %c0_i32_1 = arith.constant 0 : i32
    return %c0_i32, %c0_i32_0 : i32, i32
  }
  func.func @transform_2(%arg0: i32) -> (i32, i32) {
    %c0_i32 = arith.constant 0 : i32
    %c0_i32_0 = arith.constant 0 : i32
    %c0_i32_1 = arith.constant 0 : i32
    return %c0_i32, %c0_i32_0 : i32, i32
  }
  func.func @transform_3(%arg0: i32) -> (i32, i32) {
    %c0_i32 = arith.constant 0 : i32
    %c0_i32_0 = arith.constant 0 : i32
    return %arg0, %c0_i32 : i32, i32
  }
}

module attributes {stable_mosaic.version = 11 : i64} {
  func.func @_mm_bn_stats_kernel(%arg0: i32, %arg1: memref<32x256xbf16, #tpu.memory_space<vmem>>, %arg2: memref<256x32xbf16, #tpu.memory_space<vmem>>, %arg3: memref<32x32xbf16, #tpu.memory_space<vmem>>, %arg4: memref<1x32xf32, #tpu.memory_space<vmem>>, %arg5: memref<1x32xf32, #tpu.memory_space<vmem>>) attributes {dimension_semantics = [#tpu.dimension_semantics<arbitrary>], iteration_bounds = array<i64: 1>, scalar_prefetch = 0 : i64, scratch_operands = 0 : i64, tpu.core_type = #tpu.core_type<tc>, window_params = [{transform_indices = @transform_0, window_bounds = array<i64: 32, 256>}, {pipeline_mode = #tpu.pipeline_mode<synchronous>, transform_indices = @transform_1, window_bounds = array<i64: 256, 32>}, {transform_indices = @transform_2, window_bounds = array<i64: 32, 32>}, {pipeline_mode = #tpu.pipeline_mode<synchronous>, transform_indices = @transform_3, window_bounds = array<i64: 1, 32>}, {pipeline_mode = #tpu.pipeline_mode<synchronous>, transform_indices = @transform_4, window_bounds = array<i64: 1, 32>}]} {
    %c0_i32 = arith.constant 0 : i32
    %0 = arith.cmpi eq, %arg0, %c0_i32 : i32
    %1 = arith.extui %0 : i1 to i32
    %c0_i32_0 = arith.constant 0 : i32
    %2 = arith.cmpi ne, %1, %c0_i32_0 : i32
    scf.if %2 {
      %cst_18 = arith.constant 0.000000e+00 : f32
      %29 = vector.broadcast %cst_18 : f32 to vector<1x32xf32>
      %c0_19 = arith.constant 0 : index
      %c0_20 = arith.constant 0 : index
      %30 = vector.load %arg4[%c0_19, %c0_20] : memref<1x32xf32, #tpu.memory_space<vmem>>, vector<1x32xf32>
      tpu.vector_store %arg4[%c0_19, %c0_20], %29 {strides = array<i32>} : memref<1x32xf32, #tpu.memory_space<vmem>>, vector<1x32xf32>,
      %cst_21 = arith.constant 0.000000e+00 : f32
      %31 = vector.broadcast %cst_21 : f32 to vector<1x32xf32>
      %c0_22 = arith.constant 0 : index
      %c0_23 = arith.constant 0 : index
      %32 = vector.load %arg5[%c0_22, %c0_23] : memref<1x32xf32, #tpu.memory_space<vmem>>, vector<1x32xf32>
      tpu.vector_store %arg5[%c0_22, %c0_23], %31 {strides = array<i32>} : memref<1x32xf32, #tpu.memory_space<vmem>>, vector<1x32xf32>,
    } else {
    }
    %c0 = arith.constant 0 : index
    %c0_1 = arith.constant 0 : index
    %3 = vector.load %arg1[%c0, %c0_1] : memref<32x256xbf16, #tpu.memory_space<vmem>>, vector<32x256xbf16>
    %c0_2 = arith.constant 0 : index
    %c0_3 = arith.constant 0 : index
    %4 = vector.load %arg2[%c0_2, %c0_3] : memref<256x32xbf16, #tpu.memory_space<vmem>>, vector<256x32xbf16>
    %cst = arith.constant dense<0.000000e+00> : vector<32x32xf32>
    %5 = tpu.matmul %3, %4, %cst {dimension_numbers = #tpu.dot_dimension_numbers<[1], [0], [0], [1], [0, 0, 1, 1], [], []>} : vector<32x256xbf16>, vector<256x32xbf16>, vector<32x32xf32> -> vector<32x32xf32>
    %6 = arith.truncf %5 : vector<32x32xf32> to vector<32x32xbf16>
    %c0_4 = arith.constant 0 : index
    %c0_5 = arith.constant 0 : index
    %7 = vector.load %arg3[%c0_4, %c0_5] : memref<32x32xbf16, #tpu.memory_space<vmem>>, vector<32x32xbf16>
    tpu.vector_store %arg3[%c0_4, %c0_5], %6 {strides = array<i32>} : memref<32x32xbf16, #tpu.memory_space<vmem>>, vector<32x32xbf16>,
    %c32_i32 = arith.constant 32 : i32
    %8 = arith.muli %arg0, %c32_i32 : i32
    %9 = tpu.iota {dimensions = array<i32: 0>} : vector<32x1xi32>
    %10 = vector.broadcast %8 : i32 to vector<32x1xi32>
    %11 = arith.addi %10, %9 : vector<32x1xi32>
    %c32_i32_6 = arith.constant 32 : i32
    %12 = vector.broadcast %c32_i32_6 : i32 to vector<32x1xi32>
    %13 = arith.cmpi slt, %11, %12 : vector<32x1xi32>
    %cst_7 = arith.constant 0.000000e+00 : f32
    %14 = vector.shape_cast %13 : vector<32x1xi1> to vector<32x1xi1>
    %15 = vector.broadcast %14 : vector<32x1xi1> to vector<32x32xi1>
    %16 = vector.broadcast %cst_7 : f32 to vector<32x32xf32>
    %17 = arith.select %15, %5, %16 : vector<32x32xi1>, vector<32x32xf32>
    %c0_8 = arith.constant 0 : index
    %c0_9 = arith.constant 0 : index
    %18 = vector.load %arg4[%c0_8, %c0_9] : memref<1x32xf32, #tpu.memory_space<vmem>>, vector<1x32xf32>
    %cst_10 = arith.constant dense<0.000000e+00> : vector<32xf32>
    %19 = vector.multi_reduction <add>, %17, %cst_10 [0] : vector<32x32xf32> to vector<32xf32>
    %20 = vector.shape_cast %19 : vector<32xf32> to vector<1x32xf32>
    %21 = arith.addf %18, %20 : vector<1x32xf32>
    %c0_11 = arith.constant 0 : index
    %c0_12 = arith.constant 0 : index
    %22 = vector.load %arg4[%c0_11, %c0_12] : memref<1x32xf32, #tpu.memory_space<vmem>>, vector<1x32xf32>
    tpu.vector_store %arg4[%c0_11, %c0_12], %21 {strides = array<i32>} : memref<1x32xf32, #tpu.memory_space<vmem>>, vector<1x32xf32>,
    %c0_13 = arith.constant 0 : index
    %c0_14 = arith.constant 0 : index
    %23 = vector.load %arg5[%c0_13, %c0_14] : memref<1x32xf32, #tpu.memory_space<vmem>>, vector<1x32xf32>
    %24 = arith.mulf %17, %17 : vector<32x32xf32>
    %cst_15 = arith.constant dense<0.000000e+00> : vector<32xf32>
    %25 = vector.multi_reduction <add>, %24, %cst_15 [0] : vector<32x32xf32> to vector<32xf32>
    %26 = vector.shape_cast %25 : vector<32xf32> to vector<1x32xf32>
    %27 = arith.addf %23, %26 : vector<1x32xf32>
    %c0_16 = arith.constant 0 : index
    %c0_17 = arith.constant 0 : index
    %28 = vector.load %arg5[%c0_16, %c0_17] : memref<1x32xf32, #tpu.memory_space<vmem>>, vector<1x32xf32>
    tpu.vector_store %arg5[%c0_16, %c0_17], %27 {strides = array<i32>} : memref<1x32xf32, #tpu.memory_space<vmem>>, vector<1x32xf32>,
    return
  }
  func.func @transform_0(%arg0: i32) -> (i32, i32) {
    %c0_i32 = arith.constant 0 : i32
    %c0_i32_0 = arith.constant 0 : i32
    return %arg0, %c0_i32 : i32, i32
  }
  func.func @transform_1(%arg0: i32) -> (i32, i32) {
    %c0_i32 = arith.constant 0 : i32
    %c0_i32_0 = arith.constant 0 : i32
    %c0_i32_1 = arith.constant 0 : i32
    return %c0_i32, %c0_i32_0 : i32, i32
  }
  func.func @transform_2(%arg0: i32) -> (i32, i32) {
    %c0_i32 = arith.constant 0 : i32
    %c0_i32_0 = arith.constant 0 : i32
    return %arg0, %c0_i32 : i32, i32
  }
  func.func @transform_3(%arg0: i32) -> (i32, i32) {
    %c0_i32 = arith.constant 0 : i32
    %c0_i32_0 = arith.constant 0 : i32
    %c0_i32_1 = arith.constant 0 : i32
    return %c0_i32, %c0_i32_0 : i32, i32
  }
  func.func @transform_4(%arg0: i32) -> (i32, i32) {
    %c0_i32 = arith.constant 0 : i32
    %c0_i32_0 = arith.constant 0 : i32
    %c0_i32_1 = arith.constant 0 : i32
    return %c0_i32, %c0_i32_0 : i32, i32
  }
}

module attributes {stable_mosaic.version = 11 : i64} {
  func.func @_self_attn_kernel(%arg0: i32, %arg1: memref<1x16x32xbf16, #tpu.memory_space<vmem>>, %arg2: memref<32x4xbf16, #tpu.memory_space<vmem>>, %arg3: memref<1x4xf32, #tpu.memory_space<vmem>>, %arg4: memref<32x4xbf16, #tpu.memory_space<vmem>>, %arg5: memref<1x4xf32, #tpu.memory_space<vmem>>, %arg6: memref<32x32xbf16, #tpu.memory_space<vmem>>, %arg7: memref<1x32xf32, #tpu.memory_space<vmem>>, %arg8: memref<1x1xf32, #tpu.memory_space<vmem>>, %arg9: memref<1x16x32xbf16, #tpu.memory_space<vmem>>) attributes {dimension_semantics = [#tpu.dimension_semantics<parallel>], iteration_bounds = array<i64: 2>, scalar_prefetch = 0 : i64, scratch_operands = 0 : i64, tpu.core_type = #tpu.core_type<tc>, window_params = [{transform_indices = @transform_0, window_bounds = array<i64: 1, 16, 32>}, {pipeline_mode = #tpu.pipeline_mode<synchronous>, transform_indices = @transform_1, window_bounds = array<i64: 32, 4>}, {pipeline_mode = #tpu.pipeline_mode<synchronous>, transform_indices = @transform_2, window_bounds = array<i64: 1, 4>}, {pipeline_mode = #tpu.pipeline_mode<synchronous>, transform_indices = @transform_3, window_bounds = array<i64: 32, 4>}, {pipeline_mode = #tpu.pipeline_mode<synchronous>, transform_indices = @transform_4, window_bounds = array<i64: 1, 4>}, {pipeline_mode = #tpu.pipeline_mode<synchronous>, transform_indices = @transform_5, window_bounds = array<i64: 32, 32>}, {pipeline_mode = #tpu.pipeline_mode<synchronous>, transform_indices = @transform_6, window_bounds = array<i64: 1, 32>}, {pipeline_mode = #tpu.pipeline_mode<synchronous>, transform_indices = @transform_7, window_bounds = array<i64: 1, 1>}, {transform_indices = @transform_8, window_bounds = array<i64: 1, 16, 32>}]} {
    %c0 = arith.constant 0 : index
    %c0_0 = arith.constant 0 : index
    %c0_1 = arith.constant 0 : index
    %0 = vector.load %arg1[%c0, %c0_0, %c0_1] : memref<1x16x32xbf16, #tpu.memory_space<vmem>>, vector<1x16x32xbf16>
    %1 = vector.shape_cast %0 : vector<1x16x32xbf16> to vector<16x32xbf16>
    %c0_2 = arith.constant 0 : index
    %c0_3 = arith.constant 0 : index
    %2 = vector.load %arg2[%c0_2, %c0_3] : memref<32x4xbf16, #tpu.memory_space<vmem>>, vector<32x4xbf16>
    %cst = arith.constant dense<0.000000e+00> : vector<16x4xf32>
    %3 = tpu.matmul %1, %2, %cst {dimension_numbers = #tpu.dot_dimension_numbers<[1], [0], [0], [1], [0, 0, 1, 1], [], []>} : vector<16x32xbf16>, vector<32x4xbf16>, vector<16x4xf32> -> vector<16x4xf32>
    %c0_4 = arith.constant 0 : index
    %c0_5 = arith.constant 0 : index
    %4 = vector.load %arg3[%c0_4, %c0_5] : memref<1x4xf32, #tpu.memory_space<vmem>>, vector<1x4xf32>
    %5 = vector.broadcast %4 : vector<1x4xf32> to vector<16x4xf32>
    %6 = arith.addf %3, %5 : vector<16x4xf32>
    %c0_6 = arith.constant 0 : index
    %c0_7 = arith.constant 0 : index
    %7 = vector.load %arg4[%c0_6, %c0_7] : memref<32x4xbf16, #tpu.memory_space<vmem>>, vector<32x4xbf16>
    %cst_8 = arith.constant dense<0.000000e+00> : vector<16x4xf32>
    %8 = tpu.matmul %1, %7, %cst_8 {dimension_numbers = #tpu.dot_dimension_numbers<[1], [0], [0], [1], [0, 0, 1, 1], [], []>} : vector<16x32xbf16>, vector<32x4xbf16>, vector<16x4xf32> -> vector<16x4xf32>
    %c0_9 = arith.constant 0 : index
    %c0_10 = arith.constant 0 : index
    %9 = vector.load %arg5[%c0_9, %c0_10] : memref<1x4xf32, #tpu.memory_space<vmem>>, vector<1x4xf32>
    %10 = vector.broadcast %9 : vector<1x4xf32> to vector<16x4xf32>
    %11 = arith.addf %8, %10 : vector<16x4xf32>
    %c0_11 = arith.constant 0 : index
    %c0_12 = arith.constant 0 : index
    %12 = vector.load %arg6[%c0_11, %c0_12] : memref<32x32xbf16, #tpu.memory_space<vmem>>, vector<32x32xbf16>
    %cst_13 = arith.constant dense<0.000000e+00> : vector<16x32xf32>
    %13 = tpu.matmul %1, %12, %cst_13 {dimension_numbers = #tpu.dot_dimension_numbers<[1], [0], [0], [1], [0, 0, 1, 1], [], []>} : vector<16x32xbf16>, vector<32x32xbf16>, vector<16x32xf32> -> vector<16x32xf32>
    %c0_14 = arith.constant 0 : index
    %c0_15 = arith.constant 0 : index
    %14 = vector.load %arg7[%c0_14, %c0_15] : memref<1x32xf32, #tpu.memory_space<vmem>>, vector<1x32xf32>
    %15 = vector.broadcast %14 : vector<1x32xf32> to vector<16x32xf32>
    %16 = arith.addf %13, %15 : vector<16x32xf32>
    %17 = arith.truncf %6 : vector<16x4xf32> to vector<16x4xbf16>
    %18 = arith.truncf %11 : vector<16x4xf32> to vector<16x4xbf16>
    %cst_16 = arith.constant dense<0.000000e+00> : vector<16x16xf32>
    %19 = tpu.matmul %17, %18, %cst_16 {dimension_numbers = #tpu.dot_dimension_numbers<[1], [1], [0], [0], [0, 0, 1, 0], [], []>} : vector<16x4xbf16>, vector<16x4xbf16>, vector<16x16xf32> -> vector<16x16xf32>
    %cst_17 = arith.constant dense<0xFF800000> : vector<16xf32>
    %20 = vector.multi_reduction <maximumf>, %19, %cst_17 [1] : vector<16x16xf32> to vector<16xf32>
    %21 = vector.shape_cast %20 : vector<16xf32> to vector<16x1xf32>
    %22 = vector.broadcast %21 : vector<16x1xf32> to vector<16x16xf32>
    %23 = arith.subf %19, %22 : vector<16x16xf32>
    %24 = math.exp %23 : vector<16x16xf32>
    %cst_18 = arith.constant dense<0.000000e+00> : vector<16xf32>
    %25 = vector.multi_reduction <add>, %24, %cst_18 [1] : vector<16x16xf32> to vector<16xf32>
    %26 = vector.shape_cast %25 : vector<16xf32> to vector<16x1xf32>
    %27 = tpu.reciprocal %26 {approx = true} : vector<16x1xf32> -> vector<16x1xf32>
    %28 = vector.broadcast %27 : vector<16x1xf32> to vector<16x16xf32>
    %29 = arith.mulf %24, %28 : vector<16x16xf32>
    %30 = arith.truncf %29 : vector<16x16xf32> to vector<16x16xbf16>
    %31 = arith.truncf %16 : vector<16x32xf32> to vector<16x32xbf16>
    %cst_19 = arith.constant dense<0.000000e+00> : vector<16x32xf32>
    %32 = tpu.matmul %30, %31, %cst_19 {dimension_numbers = #tpu.dot_dimension_numbers<[1], [0], [0], [1], [0, 0, 1, 1], [], []>} : vector<16x16xbf16>, vector<16x32xbf16>, vector<16x32xf32> -> vector<16x32xf32>
    %c0_20 = arith.constant 0 : index
    %c0_21 = arith.constant 0 : index
    %33 = vector.load %arg8[%c0_20, %c0_21] : memref<1x1xf32, #tpu.memory_space<vmem>>, vector<1x1xf32>
    %34 = vector.extract %33[0, 0] : f32 from vector<1x1xf32>
    %35 = vector.broadcast %34 : f32 to vector<16x32xf32>
    %36 = arith.mulf %35, %32 : vector<16x32xf32>
    %37 = arith.extf %1 : vector<16x32xbf16> to vector<16x32xf32>
    %38 = arith.addf %36, %37 : vector<16x32xf32>
    %39 = arith.truncf %38 : vector<16x32xf32> to vector<16x32xbf16>
    %c0_22 = arith.constant 0 : index
    %c0_23 = arith.constant 0 : index
    %c0_24 = arith.constant 0 : index
    %40 = vector.load %arg9[%c0_22, %c0_23, %c0_24] : memref<1x16x32xbf16, #tpu.memory_space<vmem>>, vector<1x16x32xbf16>
    %41 = vector.shape_cast %40 : vector<1x16x32xbf16> to vector<16x32xbf16>
    %42 = vector.shape_cast %39 : vector<16x32xbf16> to vector<1x16x32xbf16>
    tpu.vector_store %arg9[%c0_22, %c0_23, %c0_24], %42 {strides = array<i32>} : memref<1x16x32xbf16, #tpu.memory_space<vmem>>, vector<1x16x32xbf16>,
    return
  }
  func.func @transform_0(%arg0: i32) -> (i32, i32, i32) {
    %c0_i32 = arith.constant 0 : i32
    %c0_i32_0 = arith.constant 0 : i32
    %c0_i32_1 = arith.constant 0 : i32
    return %arg0, %c0_i32, %c0_i32_0 : i32, i32, i32
  }
  func.func @transform_1(%arg0: i32) -> (i32, i32) {
    %c0_i32 = arith.constant 0 : i32
    %c0_i32_0 = arith.constant 0 : i32
    %c0_i32_1 = arith.constant 0 : i32
    return %c0_i32, %c0_i32_0 : i32, i32
  }
  func.func @transform_2(%arg0: i32) -> (i32, i32) {
    %c0_i32 = arith.constant 0 : i32
    %c0_i32_0 = arith.constant 0 : i32
    %c0_i32_1 = arith.constant 0 : i32
    return %c0_i32, %c0_i32_0 : i32, i32
  }
  func.func @transform_3(%arg0: i32) -> (i32, i32) {
    %c0_i32 = arith.constant 0 : i32
    %c0_i32_0 = arith.constant 0 : i32
    %c0_i32_1 = arith.constant 0 : i32
    return %c0_i32, %c0_i32_0 : i32, i32
  }
  func.func @transform_4(%arg0: i32) -> (i32, i32) {
    %c0_i32 = arith.constant 0 : i32
    %c0_i32_0 = arith.constant 0 : i32
    %c0_i32_1 = arith.constant 0 : i32
    return %c0_i32, %c0_i32_0 : i32, i32
  }
  func.func @transform_5(%arg0: i32) -> (i32, i32) {
    %c0_i32 = arith.constant 0 : i32
    %c0_i32_0 = arith.constant 0 : i32
    %c0_i32_1 = arith.constant 0 : i32
    return %c0_i32, %c0_i32_0 : i32, i32
  }
  func.func @transform_6(%arg0: i32) -> (i32, i32) {
    %c0_i32 = arith.constant 0 : i32
    %c0_i32_0 = arith.constant 0 : i32
    %c0_i32_1 = arith.constant 0 : i32
    return %c0_i32, %c0_i32_0 : i32, i32
  }
  func.func @transform_7(%arg0: i32) -> (i32, i32) {
    %c0_i32 = arith.constant 0 : i32
    %c0_i32_0 = arith.constant 0 : i32
    %c0_i32_1 = arith.constant 0 : i32
    return %c0_i32, %c0_i32_0 : i32, i32
  }
  func.func @transform_8(%arg0: i32) -> (i32, i32, i32) {
    %c0_i32 = arith.constant 0 : i32
    %c0_i32_0 = arith.constant 0 : i32
    %c0_i32_1 = arith.constant 0 : i32
    return %arg0, %c0_i32, %c0_i32_0 : i32, i32, i32
  }
}

</mosaic_0001>

<llo_original>
// kernel: discriminator_forward.4
$region0: #{discriminator_forward.4}
  #allocation0 [shape = 'u32[]', space=smem, size = 0x4, offset = 0x4, fixed_abs, tag = 'smem constant byte address 0x4 - core index']
  #allocation1 [shape = 'u32[144,128]{1,0:T(1,128)}', space=vmem, size = 0x12000, scoped, tag = 'internal scratch']
  %s0 = inlined_call_operand.vmem [shape: bf16[128,48], index: 0, kind: input, shape index: {}]
  %s1 = inlined_call_operand.vmem [shape: bf16[48,16], index: 1, kind: input, shape index: {}]
  %s2 = inlined_call_operand.vmem [shape: f32[1,16], index: 2, kind: input, shape index: {}]
  %s3 = inlined_call_operand.vmem [shape: bf16[128,16], index: 3, kind: output, shape index: {}]
  %s4 = sld [smem:[#allocation0]]
  $region22: #{discriminator_forward.4} parent=0
    _
  %s6 = ssub.s32 1, %s4
  %s7 = scalar_select 0, %s6, %s4
  // Predicated region
  $region2: #{discriminator_forward.4} parent=0 // pred_check
    _
  $region3: #{discriminator_forward.4} parent=0 // pred_check_branch
    %9 = sbr.rel (0) target = $region5
  $region4: #{discriminator_forward.4} parent=0 // pred_region
    _
  $region5: #{discriminator_forward.4} parent=0 // pred_fallthru
    _
  // Predicated region
  $region6: #{discriminator_forward.4} parent=0 // pred_check
    _
  $region7: #{discriminator_forward.4} parent=0 // pred_check_branch
    %11 = sbr.rel (0) target = $region9
  $region8: #{discriminator_forward.4} parent=0 // pred_region
    _
  $region9: #{discriminator_forward.4} parent=0 // pred_fallthru
    _
  // Predicated region
  $region10: #{discriminator_forward.4} parent=0 // pred_check
    _
  $region11: #{discriminator_forward.4} parent=0 // pred_check_branch
    %13 = sbr.rel (0) target = $region13
  $region12: #{discriminator_forward.4} parent=0 // pred_region
    _
  $region13: #{discriminator_forward.4} parent=0 // pred_fallthru
    _
  %v15 = vld [vmem:[%s0] sm:$0xf]
  %v16 = vld [vmem:[%s0 + $0x4] sm:$0xf]
  %v17 = vld [vmem:[%s0 + $0x8] sm:$0xf]
  %v18 = vld [vmem:[%s0 + $0xc] sm:$0xf]
  %v19 = vld [vmem:[%s0 + $0x10] sm:$0xf]
  %v20 = vld [vmem:[%s0 + $0x14] sm:$0xf]
  %v21 = vld [vmem:[%s0 + $0x18] sm:$0xf]
  %v22 = vld [vmem:[%s0 + $0x1c] sm:$0xf]
  %v23 = vld [vmem:[%s0 + $0x20] sm:$0xf]
  %v24 = vld [vmem:[%s0 + $0x24] sm:$0xf]
  %v25 = vld [vmem:[%s0 + $0x28] sm:$0xf]
  %v26 = vld [vmem:[%s0 + $0x2c] sm:$0xf]
  %v27 = vld [vmem:[%s0 + $0x30] sm:$0xf]
  %v28 = vld [vmem:[%s0 + $0x34] sm:$0xf]
  %v29 = vld [vmem:[%s0 + $0x38] sm:$0xf]
  %v30 = vld [vmem:[%s0 + $0x3c] sm:$0xf]
  %v31 = vld [vmem:[%s1] sm:$0xf]
  %v32 = vld [vmem:[%s1 + $0x4] sm:$0xf]
  %v33 = vld [vmem:[%s1 + $0x8] sm:$0xf]
  %v34 = vld [vmem:[%s1 + $0xc] sm:$0xf]
  %v35 = vld [vmem:[%s1 + $0x10] sm:$0xf]
  %v36 = vld [vmem:[%s1 + $0x14] sm:$0xf]
  %v37 = vld [vmem:[%s2] sm:$0x1]
  %v39 = vlaneseq
  %v40 = vshrl.u32 %v39, 7
  %v41 = vsub.s32 0, %v40
  %v42 = vrot.slane %v37, %v41
  %v60 = vunpack.c.l.b16 %v15
  %v61 = vunpack.c.l.b16 %v16
  %v62 = vunpack.c.l.b16 %v17
  %v63 = vunpack.c.l.b16 %v18
  %v64 = vunpack.c.l.b16 %v19
  %v65 = vunpack.c.l.b16 %v20
  %v66 = vunpack.c.l.b16 %v21
  %v67 = vunpack.c.l.b16 %v22
  %v68 = vunpack.c.l.b16 %v23
  %v69 = vunpack.c.l.b16 %v24
  %v70 = vunpack.c.l.b16 %v25
  %v71 = vunpack.c.l.b16 %v26
  %v72 = vunpack.c.l.b16 %v27
  %v73 = vunpack.c.l.b16 %v28
  %v74 = vunpack.c.l.b16 %v29
  %v75 = vunpack.c.l.b16 %v30
  %v76 = vpack.c.b16 %v61, %v60
  %v77 = vpack.c.b16 %v63, %v62
  %v78 = vpack.c.b16 %v65, %v64
  %v79 = vpack.c.b16 %v67, %v66
  %v80 = vpack.c.b16 %v69, %v68
  %v81 = vpack.c.b16 %v71, %v70
  %v82 = vpack.c.b16 %v73, %v72
  %v83 = vpack.c.b16 %v75, %v74
  %v90 = vunpack.c.l.b16 %v31
  %v91 = vunpack.c.l.b16 %v32
  %v92 = vunpack.c.l.b16 %v33
  %v93 = vunpack.c.l.b16 %v34
  %v94 = vunpack.c.l.b16 %v35
  %v95 = vunpack.c.l.b16 %v36
  %v96 = vpack.c.b16 %v91, %v90
  %v97 = vpack.c.b16 %v93, %v92
  %v98 = vpack.c.b16 %v95, %v94
  %vm102 = vcmask 392192
  %v104 = vsel %vm102, %v76, 0
  %v107 = vsel %vm102, %v77, 0
  %v110 = vsel %vm102, %v78, 0
  %v113 = vsel %vm102, %v79, 0
  %v116 = vsel %vm102, %v80, 0
  %v119 = vsel %vm102, %v81, 0
  %v122 = vsel %vm102, %v82, 0
  %v125 = vsel %vm102, %v83, 0
  %127 = vmatprep.subr.bf16.mxu0 0
  %128 = vmatpush1.bf16.msra.mxu0 0
  %129 = vmatprep.subr.bf16.mxu0 0
  %130 = vmatpush1.bf16.msra.mxu0 0
  %131 = vmatprep.subr.bf16.mxu0 0
  %132 = vmatpush1.bf16.msra.mxu0 0
  %133 = vmatprep.subr.bf16.mxu0 0
  %134 = vmatpush1.bf16.msra.mxu0 0
  %135 = vmatprep.subr.bf16.mxu0 0
  %136 = vmatpush1.bf16.msra.mxu0 0
  %137 = vmatprep.subr.bf16.mxu0 0
  %138 = vmatpush1.bf16.msra.mxu0 %v98
  %139 = vmatprep.subr.bf16.mxu0 0
  %140 = vmatpush1.bf16.msra.mxu0 %v97
  %141 = vmatprep.subr.bf16.mxu0 0
  %142 = vmatpush1.bf16.msra.mxu0 %v96
  %143 = vmatprep.subr.bf16.mxu0 0
  %144 = vmatpush2.bf16.msra.mxu0 0
  %145 = vmatprep.subr.bf16.mxu0 0
  %146 = vmatpush2.bf16.msra.mxu0 0
  %147 = vmatprep.subr.bf16.mxu0 0
  %148 = vmatpush2.bf16.msra.mxu0 0
  %149 = vmatprep.subr.bf16.mxu0 0
  %150 = vmatpush2.bf16.msra.mxu0 0
  %151 = vmatprep.subr.bf16.mxu0 0
  %152 = vmatpush2.bf16.msra.mxu0 0
  %153 = vmatprep.subr.bf16.mxu0 0
  %154 = vmatpush2.bf16.msra.mxu0 0
  %155 = vmatprep.subr.bf16.mxu0 0
  %156 = vmatpush2.bf16.msra.mxu0 0
  %157 = vmatprep.subr.bf16.mxu0 0
  %158 = vmatpush2.bf16.msra.mxu0 0
  %159 = vmatprep.mubr.bf16.mxu0 0
  %160 = vmatmul.mubr.bf16.gmra.mxu0 %v104
  %v161 = vpop.f32.mrf.mxu0
  %v162 = vadd.f32 %v42, %v161
  %v163 = vpop.f32.mrf.mxu0
  %v164 = vpop.f32.mrf.mxu0
  %v165 = vadd.f32 %v42, %v164
  %v166 = vpop.f32.mrf.mxu0
  %167 = vmatprep.mubr.bf16.mxu0 0
  %168 = vmatmul.mubr.bf16.gmra.mxu0 %v107
  %v169 = vpop.f32.mrf.mxu0
  %v170 = vadd.f32 %v42, %v169
  %v171 = vpop.f32.mrf.mxu0
  %v172 = vpop.f32.mrf.mxu0
  %v173 = vadd.f32 %v42, %v172
  %v174 = vpop.f32.mrf.mxu0
  %175 = vmatprep.mubr.bf16.mxu0 0
  %176 = vmatmul.mubr.bf16.gmra.mxu0 %v110
  %v177 = vpop.f32.mrf.mxu0
  %v178 = vadd.f32 %v42, %v177
  %v179 = vpop.f32.mrf.mxu0
  %v180 = vpop.f32.mrf.mxu0
  %v181 = vadd.f32 %v42, %v180
  %v182 = vpop.f32.mrf.mxu0
  %183 = vmatprep.mubr.bf16.mxu0 0
  %184 = vmatmul.mubr.bf16.gmra.mxu0 %v113
  %v185 = vpop.f32.mrf.mxu0
  %v186 = vadd.f32 %v42, %v185
  %v187 = vpop.f32.mrf.mxu0
  %v188 = vpop.f32.mrf.mxu0
  %v189 = vadd.f32 %v42, %v188
  %v190 = vpop.f32.mrf.mxu0
  %191 = vmatprep.mubr.bf16.mxu0 0
  %192 = vmatmul.mubr.bf16.gmra.mxu0 %v116
  %v193 = vpop.f32.mrf.mxu0
  %v194 = vadd.f32 %v42, %v193
  %v195 = vpop.f32.mrf.mxu0
  %v196 = vpop.f32.mrf.mxu0
  %v197 = vadd.f32 %v42, %v196
  %v198 = vpop.f32.mrf.mxu0
  %199 = vmatprep.mubr.bf16.mxu0 0
  %200 = vmatmul.mubr.bf16.gmra.mxu0 %v119
  %v201 = vpop.f32.mrf.mxu0
  %v202 = vadd.f32 %v42, %v201
  %v203 = vpop.f32.mrf.mxu0
  %v204 = vpop.f32.mrf.mxu0
  %v205 = vadd.f32 %v42, %v204
  %v206 = vpop.f32.mrf.mxu0
  %207 = vmatprep.mubr.bf16.mxu0 0
  %208 = vmatmul.mubr.bf16.gmra.mxu0 %v122
  %v209 = vpop.f32.mrf.mxu0
  %v210 = vadd.f32 %v42, %v209
  %v211 = vpop.f32.mrf.mxu0
  %v212 = vpop.f32.mrf.mxu0
  %v213 = vadd.f32 %v42, %v212
  %v214 = vpop.f32.mrf.mxu0
  %215 = vmatprep.mubr.bf16.mxu0 0
  %216 = vmatmul.mubr.bf16.gmra.mxu0 %v125
  %v217 = vpop.f32.mrf.mxu0
  %v218 = vadd.f32 %v42, %v217
  %v219 = vpop.f32.mrf.mxu0
  %v220 = vpop.f32.mrf.mxu0
  %v221 = vadd.f32 %v42, %v220
  %v222 = vpop.f32.mrf.mxu0
  %223 = vdwg.mxu0
  %vm224 = vcmp.gt.f32.partialorder %v162, 0.0
  %vm225 = vcmp.gt.f32.partialorder %v165, 0.0
  %vm226 = vcmp.gt.f32.partialorder %v170, 0.0
  %vm227 = vcmp.gt.f32.partialorder %v173, 0.0
  %vm228 = vcmp.gt.f32.partialorder %v178, 0.0
  %vm229 = vcmp.gt.f32.partialorder %v181, 0.0
  %vm230 = vcmp.gt.f32.partialorder %v186, 0.0
  %vm231 = vcmp.gt.f32.partialorder %v189, 0.0
  %vm232 = vcmp.gt.f32.partialorder %v194, 0.0
  %vm233 = vcmp.gt.f32.partialorder %v197, 0.0
  %vm234 = vcmp.gt.f32.partialorder %v202, 0.0
  %vm235 = vcmp.gt.f32.partialorder %v205, 0.0
  %vm236 = vcmp.gt.f32.partialorder %v210, 0.0
  %vm237 = vcmp.gt.f32.partialorder %v213, 0.0
  %vm238 = vcmp.gt.f32.partialorder %v218, 0.0
  %vm239 = vcmp.gt.f32.partialorder %v221, 0.0
  %v240 = vmul.f32 %v162, 0.2
  %v241 = vmul.f32 %v165, 0.2
  %v242 = vmul.f32 %v170, 0.2
  %v243 = vmul.f32 %v173, 0.2
  %v244 = vmul.f32 %v178, 0.2
  %v245 = vmul.f32 %v181, 0.2
  %v246 = vmul.f32 %v186, 0.2
  %v247 = vmul.f32 %v189, 0.2
  %v248 = vmul.f32 %v194, 0.2
  %v249 = vmul.f32 %v197, 0.2
  %v250 = vmul.f32 %v202, 0.2
  %v251 = vmul.f32 %v205, 0.2
  %v252 = vmul.f32 %v210, 0.2
  %v253 = vmul.f32 %v213, 0.2
  %v254 = vmul.f32 %v218, 0.2
  %v255 = vmul.f32 %v221, 0.2
  %v256 = vsel %vm224, %v162, %v240
  %v257 = vsel %vm225, %v165, %v241
  %v258 = vsel %vm226, %v170, %v242
  %v259 = vsel %vm227, %v173, %v243
  %v260 = vsel %vm228, %v178, %v244
  %v261 = vsel %vm229, %v181, %v245
  %v262 = vsel %vm230, %v186, %v246
  %v263 = vsel %vm231, %v189, %v247
  %v264 = vsel %vm232, %v194, %v248
  %v265 = vsel %vm233, %v197, %v249
  %v266 = vsel %vm234, %v202, %v250
  %v267 = vsel %vm235, %v205, %v251
  %v268 = vsel %vm236, %v210, %v252
  %v269 = vsel %vm237, %v213, %v253
  %v270 = vsel %vm238, %v218, %v254
  %v271 = vsel %vm239, %v221, %v255
  %v272 = vpack.c.bf16 %v257, %v256
  %v273 = vpack.c.bf16 %v259, %v258
  %v274 = vpack.c.bf16 %v261, %v260
  %v275 = vpack.c.bf16 %v263, %v262
  %v276 = vpack.c.bf16 %v265, %v264
  %v277 = vpack.c.bf16 %v267, %v266
  %v278 = vpack.c.bf16 %v269, %v268
  %v279 = vpack.c.bf16 %v271, %v270
  %v288 = vunpack.c.l.b16 %v272
  %v289 = vunpack.c.h.b16 %v272
  %v290 = vunpack.c.l.b16 %v273
  %v291 = vunpack.c.h.b16 %v273
  %v292 = vunpack.c.l.b16 %v274
  %v293 = vunpack.c.h.b16 %v274
  %v294 = vunpack.c.l.b16 %v275
  %v295 = vunpack.c.h.b16 %v275
  %v296 = vunpack.c.l.b16 %v276
  %v297 = vunpack.c.h.b16 %v276
  %v298 = vunpack.c.l.b16 %v277
  %v299 = vunpack.c.h.b16 %v277
  %v300 = vunpack.c.l.b16 %v278
  %v301 = vunpack.c.h.b16 %v278
  %v302 = vunpack.c.l.b16 %v279
  %v303 = vunpack.c.h.b16 %v279
  %v304 = vpack.c.b16 %v288, %v288
  %v305 = vpack.c.b16 %v289, %v289
  %v306 = vpack.c.b16 %v290, %v290
  %v307 = vpack.c.b16 %v291, %v291
  %v308 = vpack.c.b16 %v292, %v292
  %v309 = vpack.c.b16 %v293, %v293
  %v310 = vpack.c.b16 %v294, %v294
  %v311 = vpack.c.b16 %v295, %v295
  %v312 = vpack.c.b16 %v296, %v296
  %v313 = vpack.c.b16 %v297, %v297
  %v314 = vpack.c.b16 %v298, %v298
  %v315 = vpack.c.b16 %v299, %v299
  %v316 = vpack.c.b16 %v300, %v300
  %v317 = vpack.c.b16 %v301, %v301
  %v318 = vpack.c.b16 %v302, %v302
  %v319 = vpack.c.b16 %v303, %v303
  %vm336 = vcmask 125952
  %337 = vst.msk [vmem:[%s3] sm:$0xf] %vm336, %v304
  %338 = vst.msk [vmem:[%s3 + $0x4] sm:$0xf] %vm336, %v305
  %339 = vst.msk [vmem:[%s3 + $0x8] sm:$0xf] %vm336, %v306
  %340 = vst.msk [vmem:[%s3 + $0xc] sm:$0xf] %vm336, %v307
  %341 = vst.msk [vmem:[%s3 + $0x10] sm:$0xf] %vm336, %v308
  %342 = vst.msk [vmem:[%s3 + $0x14] sm:$0xf] %vm336, %v309
  %343 = vst.msk [vmem:[%s3 + $0x18] sm:$0xf] %vm336, %v310
  %344 = vst.msk [vmem:[%s3 + $0x1c] sm:$0xf] %vm336, %v311
  %345 = vst.msk [vmem:[%s3 + $0x20] sm:$0xf] %vm336, %v312
  %346 = vst.msk [vmem:[%s3 + $0x24] sm:$0xf] %vm336, %v313
  %347 = vst.msk [vmem:[%s3 + $0x28] sm:$0xf] %vm336, %v314
  %348 = vst.msk [vmem:[%s3 + $0x2c] sm:$0xf] %vm336, %v315
  %349 = vst.msk [vmem:[%s3 + $0x30] sm:$0xf] %vm336, %v316
  %350 = vst.msk [vmem:[%s3 + $0x34] sm:$0xf] %vm336, %v317
  %351 = vst.msk [vmem:[%s3 + $0x38] sm:$0xf] %vm336, %v318
  %352 = vst.msk [vmem:[%s3 + $0x3c] sm:$0xf] %vm336, %v319
  // Predicated region
  $region14: #{discriminator_forward.4} parent=0 // pred_check
    _
  $region15: #{discriminator_forward.4} parent=0 // pred_check_branch
    %354 = sbr.rel (0) target = $region17
  $region16: #{discriminator_forward.4} parent=0 // pred_region
    _
  $region17: #{discriminator_forward.4} parent=0 // pred_fallthru
    _
  // Predicated region
  $region18: #{discriminator_forward.4} parent=0 // pred_check
    _
  $region19: #{discriminator_forward.4} parent=0 // pred_check_branch
    %356 = sbr.rel (0) target = $region21
  $region20: #{discriminator_forward.4} parent=0 // pred_region
    _
  $region21: #{discriminator_forward.4} parent=0 // pred_fallthru
    _

// kernel: discriminator_forward.6
$region0: #{discriminator_forward.6}
  #allocation0 [shape = 'u32[]', space=smem, size = 0x4, offset = 0x4, fixed_abs, tag = 'smem constant byte address 0x4 - core index']
  #allocation1 [shape = 'u32[144,128]{1,0:T(1,128)}', space=vmem, size = 0x12000, scoped, tag = 'internal scratch']
  %s0 = inlined_call_operand.vmem [shape: bf16[32,32], index: 0, kind: input, shape index: {}]
  %s1 = inlined_call_operand.vmem [shape: f32[1,32], index: 1, kind: input, shape index: {}]
  %s2 = inlined_call_operand.vmem [shape: f32[1,32], index: 2, kind: input, shape index: {}]
  %s3 = inlined_call_operand.vmem [shape: bf16[32,32], index: 3, kind: output, shape index: {}]
  %s4 = sld [smem:[#allocation0]]
  $region22: #{discriminator_forward.6} parent=0
    _
  %s6 = ssub.s32 1, %s4
  %s7 = scalar_select 0, %s6, %s4
  // Predicated region
  $region2: #{discriminator_forward.6} parent=0 // pred_check
    _
  $region3: #{discriminator_forward.6} parent=0 // pred_check_branch
    %9 = sbr.rel (0) target = $region5
  $region4: #{discriminator_forward.6} parent=0 // pred_region
    _
  $region5: #{discriminator_forward.6} parent=0 // pred_fallthru
    _
  // Predicated region
  $region6: #{discriminator_forward.6} parent=0 // pred_check
    _
  $region7: #{discriminator_forward.6} parent=0 // pred_check_branch
    %11 = sbr.rel (0) target = $region9
  $region8: #{discriminator_forward.6} parent=0 // pred_region
    _
  $region9: #{discriminator_forward.6} parent=0 // pred_fallthru
    _
  // Predicated region
  $region10: #{discriminator_forward.6} parent=0 // pred_check
    _
  $region11: #{discriminator_forward.6} parent=0 // pred_check_branch
    %13 = sbr.rel (0) target = $region13
  $region12: #{discriminator_forward.6} parent=0 // pred_region
    _
  $region13: #{discriminator_forward.6} parent=0 // pred_fallthru
    _
  %v14 = vld [vmem:[%s0] sm:$0xf]
  %v15 = vld [vmem:[%s0 + $0x4] sm:$0xf]
  %v16 = vld [vmem:[%s0 + $0x8] sm:$0xf]
  %v17 = vld [vmem:[%s0 + $0xc] sm:$0xf]
  %v18 = vunpack.c.l.bf16 %v14
  %v19 = vunpack.c.l.bf16 %v15
  %v20 = vunpack.c.l.bf16 %v16
  %v21 = vunpack.c.l.bf16 %v17
  %v22 = vld [vmem:[%s1] sm:$0x1]
  %v24 = vlaneseq
  %v25 = vshrl.u32 %v24, 7
  %v26 = vsub.s32 0, %v25
  %v27 = vrot.slane %v22, %v26
  %v29 = vmul.f32 %v18, %v27
  %v30 = vmul.f32 %v19, %v27
  %v31 = vmul.f32 %v20, %v27
  %v32 = vmul.f32 %v21, %v27
  %v33 = vld [vmem:[%s2] sm:$0x1]
  %v35 = vlaneseq
  %v36 = vshrl.u32 %v35, 7
  %v37 = vsub.s32 0, %v36
  %v38 = vrot.slane %v33, %v37
  %v40 = vadd.f32 %v29, %v38
  %v41 = vadd.f32 %v30, %v38
  %v42 = vadd.f32 %v31, %v38
  %v43 = vadd.f32 %v32, %v38
  %vm44 = vcmp.gt.f32.partialorder %v40, 0.0
  %vm45 = vcmp.gt.f32.partialorder %v41, 0.0
  %vm46 = vcmp.gt.f32.partialorder %v42, 0.0
  %vm47 = vcmp.gt.f32.partialorder %v43, 0.0
  %v48 = vmul.f32 %v40, 0.2
  %v49 = vmul.f32 %v41, 0.2
  %v50 = vmul.f32 %v42, 0.2
  %v51 = vmul.f32 %v43, 0.2
  %v52 = vsel %vm44, %v40, %v48
  %v53 = vsel %vm45, %v41, %v49
  %v54 = vsel %vm46, %v42, %v50
  %v55 = vsel %vm47, %v43, %v51
  %v56 = vpack.c.bf16 %v53, %v52
  %v57 = vpack.c.bf16 %v55, %v54
  %v60 = vunpack.c.l.b16 %v56
  %v61 = vunpack.c.h.b16 %v56
  %v62 = vunpack.c.l.b16 %v57
  %v63 = vunpack.c.h.b16 %v57
  %v64 = vpack.c.b16 %v60, %v60
  %v65 = vpack.c.b16 %v61, %v61
  %v66 = vpack.c.b16 %v62, %v62
  %v67 = vpack.c.b16 %v63, %v63
  %vm72 = vcmask 257024
  %73 = vst.msk [vmem:[%s3] sm:$0xf] %vm72, %v64
  %74 = vst.msk [vmem:[%s3 + $0x4] sm:$0xf] %vm72, %v65
  %75 = vst.msk [vmem:[%s3 + $0x8] sm:$0xf] %vm72, %v66
  %76 = vst.msk [vmem:[%s3 + $0xc] sm:$0xf] %vm72, %v67
  // Predicated region
  $region14: #{discriminator_forward.6} parent=0 // pred_check
    _
  $region15: #{discriminator_forward.6} parent=0 // pred_check_branch
    %78 = sbr.rel (0) target = $region17
  $region16: #{discriminator_forward.6} parent=0 // pred_region
    _
  $region17: #{discriminator_forward.6} parent=0 // pred_fallthru
    _
  // Predicated region
  $region18: #{discriminator_forward.6} parent=0 // pred_check
    _
  $region19: #{discriminator_forward.6} parent=0 // pred_check_branch
    %80 = sbr.rel (0) target = $region21
  $region20: #{discriminator_forward.6} parent=0 // pred_region
    _
  $region21: #{discriminator_forward.6} parent=0 // pred_fallthru
    _

// kernel: discriminator_forward.5
$region0: #{discriminator_forward.5}
  #allocation0 [shape = 'u32[]', space=smem, size = 0x4, offset = 0x4, fixed_abs, tag = 'smem constant byte address 0x4 - core index']
  #allocation1 [shape = 'u32[144,128]{1,0:T(1,128)}', space=vmem, size = 0x12000, scoped, tag = 'internal scratch']
  %s0 = inlined_call_operand.vmem [shape: bf16[32,256], index: 0, kind: input, shape index: {}]
  %s1 = inlined_call_operand.vmem [shape: bf16[256,32], index: 1, kind: input, shape index: {}]
  %s2 = inlined_call_operand.vmem [shape: bf16[32,32], index: 2, kind: output, shape index: {0}]
  %s3 = inlined_call_operand.vmem [shape: f32[1,32], index: 3, kind: output, shape index: {1}]
  %s4 = inlined_call_operand.vmem [shape: f32[1,32], index: 4, kind: output, shape index: {2}]
  %5 = xla_tuple %s2, %s3, %s4
  %s6 = sld [smem:[#allocation0]]
  $region38: #{discriminator_forward.5} parent=0
    _
  %s8 = ssub.s32 1, %s6
  %s9 = scalar_select 0, %s8, %s6
  // Predicated region
  $region2: #{discriminator_forward.5} parent=0 // pred_check
    _
  $region3: #{discriminator_forward.5} parent=0 // pred_check_branch
    %11 = sbr.rel (0) target = $region5
  $region4: #{discriminator_forward.5} parent=0 // pred_region
    _
  $region5: #{discriminator_forward.5} parent=0 // pred_fallthru
    _
  // Predicated region
  $region6: #{discriminator_forward.5} parent=0 // pred_check
    _
  $region7: #{discriminator_forward.5} parent=0 // pred_check_branch
    %13 = sbr.rel (0) target = $region9
  $region8: #{discriminator_forward.5} parent=0 // pred_region
    _
  $region9: #{discriminator_forward.5} parent=0 // pred_fallthru
    _
  %p15 = scmp.eq.s32.totalorder 0, 0
  // Predicated region
  $region10: #{discriminator_forward.5} parent=0 // pred_check
    %p16 = pneg %p15
  $region11: #{discriminator_forward.5} parent=0 // pred_check_branch
    %18 = sbr.rel (%p16) target = $region13
  $region12: #{discriminator_forward.5} parent=0 // pred_region
    %vm19 = vcmask 253952
    %20 = vst.msk [vmem:[%s3] sm:$0x1] %vm19, 0.0
    %21 = vst.msk [vmem:[%s4] sm:$0x1] %vm19, 0.0
  $region13: #{discriminator_forward.5} parent=0 // pred_fallthru
    _
  %v22 = vld [vmem:[%s0] sm:$0xff]
  %v23 = vld [vmem:[%s0 + $0x8] sm:$0xff]
  %v24 = vld [vmem:[%s0 + $0x10] sm:$0xff]
  %v25 = vld [vmem:[%s0 + $0x18] sm:$0xff]
  %v26 = vld [vmem:[%s1] sm:$0xf]
  %v27 = vld [vmem:[%s1 + $0x4] sm:$0xf]
  %v28 = vld [vmem:[%s1 + $0x8] sm:$0xf]
  %v29 = vld [vmem:[%s1 + $0xc] sm:$0xf]
  %v30 = vld [vmem:[%s1 + $0x10] sm:$0xf]
  %v31 = vld [vmem:[%s1 + $0x14] sm:$0xf]
  %v32 = vld [vmem:[%s1 + $0x18] sm:$0xf]
  %v33 = vld [vmem:[%s1 + $0x1c] sm:$0xf]
  %v34 = vld [vmem:[%s1 + $0x20] sm:$0xf]
  %v35 = vld [vmem:[%s1 + $0x24] sm:$0xf]
  %v36 = vld [vmem:[%s1 + $0x28] sm:$0xf]
  %v37 = vld [vmem:[%s1 + $0x2c] sm:$0xf]
  %v38 = vld [vmem:[%s1 + $0x30] sm:$0xf]
  %v39 = vld [vmem:[%s1 + $0x34] sm:$0xf]
  %v40 = vld [vmem:[%s1 + $0x38] sm:$0xf]
  %v41 = vld [vmem:[%s1 + $0x3c] sm:$0xf]
  %v42 = vld [vmem:[%s1 + $0x40] sm:$0xf]
  %v43 = vld [vmem:[%s1 + $0x44] sm:$0xf]
  %v44 = vld [vmem:[%s1 + $0x48] sm:$0xf]
  %v45 = vld [vmem:[%s1 + $0x4c] sm:$0xf]
  %v46 = vld [vmem:[%s1 + $0x50] sm:$0xf]
  %v47 = vld [vmem:[%s1 + $0x54] sm:$0xf]
  %v48 = vld [vmem:[%s1 + $0x58] sm:$0xf]
  %v49 = vld [vmem:[%s1 + $0x5c] sm:$0xf]
  %v50 = vld [vmem:[%s1 + $0x60] sm:$0xf]
  %v51 = vld [vmem:[%s1 + $0x64] sm:$0xf]
  %v52 = vld [vmem:[%s1 + $0x68] sm:$0xf]
  %v53 = vld [vmem:[%s1 + $0x6c] sm:$0xf]
  %v54 = vld [vmem:[%s1 + $0x70] sm:$0xf]
  %v55 = vld [vmem:[%s1 + $0x74] sm:$0xf]
  %v56 = vld [vmem:[%s1 + $0x78] sm:$0xf]
  %v57 = vld [vmem:[%s1 + $0x7c] sm:$0xf]
  %v62 = vunpack.c.l.b16 %v22
  %v63 = vunpack.c.h.b16 %v22
  %v64 = vunpack.c.l.b16 %v23
  %v65 = vunpack.c.h.b16 %v23
  %v66 = vunpack.c.l.b16 %v24
  %v67 = vunpack.c.h.b16 %v24
  %v68 = vunpack.c.l.b16 %v25
  %v69 = vunpack.c.h.b16 %v25
  %v70 = vpack.c.b16 %v64, %v62
  %v71 = vpack.c.b16 %v65, %v63
  %v72 = vpack.c.b16 %v68, %v66
  %v73 = vpack.c.b16 %v69, %v67
  %v110 = vunpack.c.l.b16 %v26
  %v111 = vunpack.c.l.b16 %v27
  %v112 = vunpack.c.l.b16 %v28
  %v113 = vunpack.c.l.b16 %v29
  %v114 = vunpack.c.l.b16 %v30
  %v115 = vunpack.c.l.b16 %v31
  %v116 = vunpack.c.l.b16 %v32
  %v117 = vunpack.c.l.b16 %v33
  %v118 = vunpack.c.l.b16 %v34
  %v119 = vunpack.c.l.b16 %v35
  %v120 = vunpack.c.l.b16 %v36
  %v121 = vunpack.c.l.b16 %v37
  %v122 = vunpack.c.l.b16 %v38
  %v123 = vunpack.c.l.b16 %v39
  %v124 = vunpack.c.l.b16 %v40
  %v125 = vunpack.c.l.b16 %v41
  %v126 = vunpack.c.l.b16 %v42
  %v127 = vunpack.c.l.b16 %v43
  %v128 = vunpack.c.l.b16 %v44
  %v129 = vunpack.c.l.b16 %v45
  %v130 = vunpack.c.l.b16 %v46
  %v131 = vunpack.c.l.b16 %v47
  %v132 = vunpack.c.l.b16 %v48
  %v133 = vunpack.c.l.b16 %v49
  %v134 = vunpack.c.l.b16 %v50
  %v135 = vunpack.c.l.b16 %v51
  %v136 = vunpack.c.l.b16 %v52
  %v137 = vunpack.c.l.b16 %v53
  %v138 = vunpack.c.l.b16 %v54
  %v139 = vunpack.c.l.b16 %v55
  %v140 = vunpack.c.l.b16 %v56
  %v141 = vunpack.c.l.b16 %v57
  %v142 = vpack.c.b16 %v111, %v110
  %v143 = vpack.c.b16 %v113, %v112
  %v144 = vpack.c.b16 %v115, %v114
  %v145 = vpack.c.b16 %v117, %v116
  %v146 = vpack.c.b16 %v119, %v118
  %v147 = vpack.c.b16 %v121, %v120
  %v148 = vpack.c.b16 %v123, %v122
  %v149 = vpack.c.b16 %v125, %v124
  %v150 = vpack.c.b16 %v127, %v126
  %v151 = vpack.c.b16 %v129, %v128
  %v152 = vpack.c.b16 %v131, %v130
  %v153 = vpack.c.b16 %v133, %v132
  %v154 = vpack.c.b16 %v135, %v134
  %v155 = vpack.c.b16 %v137, %v136
  %v156 = vpack.c.b16 %v139, %v138
  %v157 = vpack.c.b16 %v141, %v140
  %174 = vmatprep.subr.bf16.mxu0 0
  %175 = vmatpush1.bf16.msra.mxu0 %v149
  %176 = vmatprep.subr.bf16.mxu0 0
  %177 = vmatpush1.bf16.msra.mxu0 %v148
  %178 = vmatprep.subr.bf16.mxu0 0
  %179 = vmatpush1.bf16.msra.mxu0 %v147
  %180 = vmatprep.subr.bf16.mxu0 0
  %181 = vmatpush1.bf16.msra.mxu0 %v146
  %182 = vmatprep.subr.bf16.mxu0 0
  %183 = vmatpush1.bf16.msra.mxu0 %v145
  %184 = vmatprep.subr.bf16.mxu0 0
  %185 = vmatpush1.bf16.msra.mxu0 %v144
  %186 = vmatprep.subr.bf16.mxu0 0
  %187 = vmatpush1.bf16.msra.mxu0 %v143
  %188 = vmatprep.subr.bf16.mxu0 0
  %189 = vmatpush1.bf16.msra.mxu0 %v142
  %190 = vmatprep.subr.bf16.mxu0 0
  %191 = vmatpush2.bf16.msra.mxu0 %v157
  %192 = vmatprep.subr.bf16.mxu0 0
  %193 = vmatpush2.bf16.msra.mxu0 %v156
  %194 = vmatprep.subr.bf16.mxu0 0
  %195 = vmatpush2.bf16.msra.mxu0 %v155
  %196 = vmatprep.subr.bf16.mxu0 0
  %197 = vmatpush2.bf16.msra.mxu0 %v154
  %198 = vmatprep.subr.bf16.mxu0 0
  %199 = vmatpush2.bf16.msra.mxu0 %v153
  %200 = vmatprep.subr.bf16.mxu0 0
  %201 = vmatpush2.bf16.msra.mxu0 %v152
  %202 = vmatprep.subr.bf16.mxu0 0
  %203 = vmatpush2.bf16.msra.mxu0 %v151
  %204 = vmatprep.subr.bf16.mxu0 0
  %205 = vmatpush2.bf16.msra.mxu0 %v150
  %206 = vmatprep.mubr.bf16.mxu0 %v71
  %207 = vmatmul.mubr.bf16.gmra.mxu0 %v70
  %v208 = vpop.f32.mrf.mxu0
  %v209 = vadd.f32 0.0, %v208
  %v210 = vpop.f32.mrf.mxu0
  %v211 = vpop.f32.mrf.mxu0
  %v212 = vadd.f32 0.0, %v211
  %v213 = vpop.f32.mrf.mxu0
  %214 = vmatprep.mubr.bf16.mxu0 %v73
  %215 = vmatmul.mubr.bf16.gmra.mxu0 %v72
  %v216 = vpop.f32.mrf.mxu0
  %v217 = vadd.f32 0.0, %v216
  %v218 = vpop.f32.mrf.mxu0
  %v219 = vpop.f32.mrf.mxu0
  %v220 = vadd.f32 0.0, %v219
  %v221 = vpop.f32.mrf.mxu0
  %222 = vdwg.mxu0
  %v223 = vpack.c.bf16 %v212, %v209
  %v224 = vpack.c.bf16 %v220, %v217
  %v227 = vunpack.c.l.b16 %v223
  %v228 = vunpack.c.h.b16 %v223
  %v229 = vunpack.c.l.b16 %v224
  %v230 = vunpack.c.h.b16 %v224
  %v231 = vpack.c.b16 %v227, %v227
  %v232 = vpack.c.b16 %v228, %v228
  %v233 = vpack.c.b16 %v229, %v229
  %v234 = vpack.c.b16 %v230, %v230
  %vm239 = vcmask 257024
  %240 = vst.msk [vmem:[%s2] sm:$0xf] %vm239, %v231
  %241 = vst.msk [vmem:[%s2 + $0x4] sm:$0xf] %vm239, %v232
  %242 = vst.msk [vmem:[%s2 + $0x8] sm:$0xf] %vm239, %v233
  %243 = vst.msk [vmem:[%s2 + $0xc] sm:$0xf] %vm239, %v234
  %s244 = smul.u32 0, 32
  %v245 = vlaneseq
  %v246 = vshrl.u32 %v245, 7
  %v247 = vadd.s32 %v246, 8
  %v248 = vadd.s32 %v246, 16
  %v249 = vadd.s32 %v246, 24
  %v250 = vstv %s244
  %v251 = vadd.s32 %v250, %v246
  %v252 = vadd.s32 %v250, %v247
  %v253 = vadd.s32 %v250, %v248
  %v254 = vadd.s32 %v250, %v249
  %vm255 = vcmp.lt.s32.totalorder %v251, 32
  %vm256 = vcmp.lt.s32.totalorder %v252, 32
  %vm257 = vcmp.lt.s32.totalorder %v253, 32
  %vm258 = vcmp.lt.s32.totalorder %v254, 32
  %v259 = vsel %vm255, 1, 0
  %v260 = vsel %vm256, 1, 0
  %v261 = vsel %vm257, 1, 0
  %v262 = vsel %vm258, 1, 0
  %vm263 = vcmp.eq.s32.totalorder %v259, 1
  %vm264 = vcmp.eq.s32.totalorder %v260, 1
  %vm265 = vcmp.eq.s32.totalorder %v261, 1
  %vm266 = vcmp.eq.s32.totalorder %v262, 1
  %v267 = vsel %vm263, %v209, 0.0
  %v268 = vsel %vm264, %v212, 0.0
  %v269 = vsel %vm265, %v217, 0.0
  %v270 = vsel %vm266, %v220, 0.0
  %v271 = vld [vmem:[%s3] sm:$0x1]
  %vm272 = vcmask 261120
  %v273 = vsel %vm272, %v267, 0.0
  %v274 = vsel %vm272, %v268, 0.0
  %v275 = vadd.f32 %v273, %v274
  %v276 = vsel %vm272, %v269, 0.0
  %v277 = vadd.f32 %v275, %v276
  %v278 = vsel %vm272, %v270, 0.0
  %v279 = vadd.f32 %v277, %v278
  %v280 = vrot.slane %v279, 4
  %v281 = vadd.f32 %v279, %v280
  %v282 = vrot.slane %v281, 2
  %v283 = vadd.f32 %v281, %v282
  %v284 = vrot.slane %v283, 1
  %v285 = vadd.f32 %v283, %v284
  %v286 = vadd.f32 %v271, %v285
  %vm287 = vcmask 253952
  %288 = vst.msk [vmem:[%s3] sm:$0x1] %vm287, %v286
  %v289 = vld [vmem:[%s4] sm:$0x1]
  %v290 = vmul.f32 %v267, %v267
  %v291 = vmul.f32 %v268, %v268
  %v292 = vmul.f32 %v269, %v269
  %v293 = vmul.f32 %v270, %v270
  %v294 = vsel %vm272, %v290, 0.0
  %v295 = vsel %vm272, %v291, 0.0
  %v296 = vadd.f32 %v294, %v295
  %v297 = vsel %vm272, %v292, 0.0
  %v298 = vadd.f32 %v296, %v297
  %v299 = vsel %vm272, %v293, 0.0
  %v300 = vadd.f32 %v298, %v299
  %v301 = vrot.slane %v300, 4
  %v302 = vadd.f32 %v300, %v301
  %v303 = vrot.slane %v302, 2
  %v304 = vadd.f32 %v302, %v303
  %v305 = vrot.slane %v304, 1
  %v306 = vadd.f32 %v304, %v305
  %v307 = vadd.f32 %v289, %v306
  %308 = vst.msk [vmem:[%s4] sm:$0x1] %vm287, %v307
  // Predicated region
  $region14: #{discriminator_forward.5} parent=0 // pred_check
    _
  $region15: #{discriminator_forward.5} parent=0 // pred_check_branch
    %310 = sbr.rel (0) target = $region17
  $region16: #{discriminator_forward.5} parent=0 // pred_region
    _
  $region17: #{discriminator_forward.5} parent=0 // pred_fallthru
    _
  // Predicated region
  $region18: #{discriminator_forward.5} parent=0 // pred_check
    _
  $region19: #{discriminator_forward.5} parent=0 // pred_check_branch
    %312 = sbr.rel (0) target = $region21
  $region20: #{discriminator_forward.5} parent=0 // pred_region
    _
  $region21: #{discriminator_forward.5} parent=0 // pred_fallthru
    _
  // Predicated region
  $region22: #{discriminator_forward.5} parent=0 // pred_check
    _
  $region23: #{discriminator_forward.5} parent=0 // pred_check_branch
    %314 = sbr.rel (0) target = $region25
  $region24: #{discriminator_forward.5} parent=0 // pred_region
    _
  $region25: #{discriminator_forward.5} parent=0 // pred_fallthru
    _
  // Predicated region
  $region26: #{discriminator_forward.5} parent=0 // pred_check
    _
  $region27: #{discriminator_forward.5} parent=0 // pred_check_branch
    %316 = sbr.rel (0) target = $region29
  $region28: #{discriminator_forward.5} parent=0 // pred_region
    _
  $region29: #{discriminator_forward.5} parent=0 // pred_fallthru
    _
  // Predicated region
  $region30: #{discriminator_forward.5} parent=0 // pred_check
    _
  $region31: #{discriminator_forward.5} parent=0 // pred_check_branch
    %318 = sbr.rel (0) target = $region33
  $region32: #{discriminator_forward.5} parent=0 // pred_region
    _
  $region33: #{discriminator_forward.5} parent=0 // pred_fallthru
    _
  // Predicated region
  $region34: #{discriminator_forward.5} parent=0 // pred_check
    _
  $region35: #{discriminator_forward.5} parent=0 // pred_check_branch
    %320 = sbr.rel (0) target = $region37
  $region36: #{discriminator_forward.5} parent=0 // pred_region
    _
  $region37: #{discriminator_forward.5} parent=0 // pred_fallthru
    _

// kernel: discriminator_forward.7
$region0: #{discriminator_forward.7}
  #allocation0 [shape = 'u32[]', space=smem, size = 0x4, offset = 0x4, fixed_abs, tag = 'smem constant byte address 0x4 - core index']
  #allocation1 [shape = 'u32[144,128]{1,0:T(1,128)}', space=vmem, size = 0x12000, scoped, tag = 'internal scratch']
  #allocation2 [shape = 'f32[1,1]{1,0:T(1,128)S(1)}', space=vmem, size = 0x200, scoped, tag = 'scoped memory for discriminator_forward.7']
  %s0 = inlined_call_operand.vmem [shape: bf16[2,16,32], index: 0, kind: input, shape index: {}]
  %s1 = inlined_call_operand.vmem [shape: bf16[32,4], index: 1, kind: input, shape index: {}]
  %s2 = inlined_call_operand.vmem [shape: f32[1,4], index: 2, kind: input, shape index: {}]
  %s3 = inlined_call_operand.vmem [shape: bf16[32,4], index: 3, kind: input, shape index: {}]
  %s4 = inlined_call_operand.vmem [shape: f32[1,4], index: 4, kind: input, shape index: {}]
  %s5 = inlined_call_operand.vmem [shape: bf16[32,32], index: 5, kind: input, shape index: {}]
  %s6 = inlined_call_operand.vmem [shape: f32[1,32], index: 6, kind: input, shape index: {}]
  %s7 = inlined_call_operand.<no memory space> [shape: f32[1,1], index: 7, kind: input, shape index: {}]
  %s8 = inlined_call_operand.vmem [shape: bf16[2,16,32], index: 8, kind: output, shape index: {}]
  %s9 = sld [smem:[#allocation0]]
  $region65: #{discriminator_forward.7} parent=0
    _
  %s11 = ssub.s32 1, %s9
  %s12 = scalar_select 0, %s11, %s9
  %v13 = vstv %s7
  %14 = vst [vmem:[#allocation2] sm:$0x1] %v13
  loop: start=0, step=1, limit=4
  $region2: #{discriminator_forward.7} parent=0 // loop_pre_header
    _
  $region3: #{discriminator_forward.7} parent=0 // loop_header
    %s16 = sphi 0, %s20
    %p17 = scmp.ge.s32.totalorder %s16, 4
    %s26 = sphi 0, %s28
    %s29 = sphi 0, %s26
    %s30 = sphi 0, %s29
    %s46 = sphi 0, %s30
    %s50 = sphi 0, %s50
    %s52 = sphi 0, %s50
    %s53 = sphi 0, %s52
    %s67 = sphi 0, %s53
    %s71 = sphi 0, %s71
    %s73 = sphi 0, %s71
    %s74 = sphi 0, %s73
    %s88 = sphi 0, %s74
    %s92 = sphi 0, %s92
    %s94 = sphi 0, %s92
    %s95 = sphi 0, %s94
    %s109 = sphi 0, %s95
    %s113 = sphi 0, %s113
    %s115 = sphi 0, %s113
    %s116 = sphi 0, %s115
    %s130 = sphi 0, %s116
    %s134 = sphi 0, %s134
    %s136 = sphi 0, %s134
    %s137 = sphi 0, %s136
    %s151 = sphi 0, %s137
    %s155 = sphi 0, %s155
    %s157 = sphi 0, %s155
    %s158 = sphi 0, %s157
    %s172 = sphi 0, %s158
    %s176 = sphi 0, %s176
    %s178 = sphi 0, %s176
    %s179 = sphi 0, %s178
    %s193 = sphi 0, %s179
    %s199 = sphi 0, %s201
    %s202 = sphi 0, %s199
    %s203 = sphi 0, %s202
    %s219 = sphi 0, %s203
  $region4: #{discriminator_forward.7} parent=0 // loop_header_branch
    %19 = sbr.rel (%p17) target = $region8
  $region5: #{discriminator_forward.7} parent=0 // loop_body
    %s21 = ssub.s32 %s16, 1
    %s22 = ssub.s32 %s16, 2
    %s23 = sadd.s32 %s16, 1
    %s24 = ssub.s32 %s16, %s23
    %p25 = scmp.eq.s32.totalorder %s24, 0
    %s27 = sadd.s32 %s26, 1
    %s28 = scalar_select %p25, %s26, %s27
    %p31 = pneg %p25
    %p32 = scmp.eq.s32.totalorder %s16, 1
    %p33 = por %p31, %p32
    %p34 = scmp.ne.s32.totalorder %s26, %s29
    %p35 = scmp.eq.s32.totalorder %s16, 0
    %p36 = por %p34, %p35
    %p37 = scmp.ne.s32.totalorder %s26, %s29
    %p38 = scmp.eq.s32.totalorder %s21, 1
    %p39 = por %p37, %p38
    %p40 = scmp.ne.s32.totalorder %s29, %s30
    %p41 = scmp.eq.s32.totalorder %s21, 0
    %p42 = por %p40, %p41
    %p43 = scmp.ne.s32.totalorder %s29, %s30
    %p44 = scmp.eq.s32.totalorder %s22, 1
    %p45 = por %p43, %p44
    %p47 = scmp.ne.s32.totalorder %s30, %s46
    %p48 = scmp.eq.s32.totalorder %s22, 0
    %p49 = por %p47, %p48
    %s51 = sadd.s32 %s50, 1
    %p54 = scmp.eq.s32.totalorder %s16, 1
    %p55 = scmp.ne.s32.totalorder %s50, %s52
    %p56 = scmp.eq.s32.totalorder %s16, 0
    %p57 = por %p55, %p56
    %p58 = scmp.ne.s32.totalorder %s50, %s52
    %p59 = scmp.eq.s32.totalorder %s21, 1
    %p60 = por %p58, %p59
    %p61 = scmp.ne.s32.totalorder %s52, %s53
    %p62 = scmp.eq.s32.totalorder %s21, 0
    %p63 = por %p61, %p62
    %p64 = scmp.ne.s32.totalorder %s52, %s53
    %p65 = scmp.eq.s32.totalorder %s22, 1
    %p66 = por %p64, %p65
    %p68 = scmp.ne.s32.totalorder %s53, %s67
    %p69 = scmp.eq.s32.totalorder %s22, 0
    %p70 = por %p68, %p69
    %s72 = sadd.s32 %s71, 1
    %p75 = scmp.eq.s32.totalorder %s16, 1
    %p76 = scmp.ne.s32.totalorder %s71, %s73
    %p77 = scmp.eq.s32.totalorder %s16, 0
    %p78 = por %p76, %p77
    %p79 = scmp.ne.s32.totalorder %s71, %s73
    %p80 = scmp.eq.s32.totalorder %s21, 1
    %p81 = por %p79, %p80
    %p82 = scmp.ne.s32.totalorder %s73, %s74
    %p83 = scmp.eq.s32.totalorder %s21, 0
    %p84 = por %p82, %p83
    %p85 = scmp.ne.s32.totalorder %s73, %s74
    %p86 = scmp.eq.s32.totalorder %s22, 1
    %p87 = por %p85, %p86
    %p89 = scmp.ne.s32.totalorder %s74, %s88
    %p90 = scmp.eq.s32.totalorder %s22, 0
    %p91 = por %p89, %p90
    %s93 = sadd.s32 %s92, 1
    %p96 = scmp.eq.s32.totalorder %s16, 1
    %p97 = scmp.ne.s32.totalorder %s92, %s94
    %p98 = scmp.eq.s32.totalorder %s16, 0
    %p99 = por %p97, %p98
    %p100 = scmp.ne.s32.totalorder %s92, %s94
    %p101 = scmp.eq.s32.totalorder %s21, 1
    %p102 = por %p100, %p101
    %p103 = scmp.ne.s32.totalorder %s94, %s95
    %p104 = scmp.eq.s32.totalorder %s21, 0
    %p105 = por %p103, %p104
    %p106 = scmp.ne.s32.totalorder %s94, %s95
    %p107 = scmp.eq.s32.totalorder %s22, 1
    %p108 = por %p106, %p107
    %p110 = scmp.ne.s32.totalorder %s95, %s109
    %p111 = scmp.eq.s32.totalorder %s22, 0
    %p112 = por %p110, %p111
    %s114 = sadd.s32 %s113, 1
    %p117 = scmp.eq.s32.totalorder %s16, 1
    %p118 = scmp.ne.s32.totalorder %s113, %s115
    %p119 = scmp.eq.s32.totalorder %s16, 0
    %p120 = por %p118, %p119
    %p121 = scmp.ne.s32.totalorder %s113, %s115
    %p122 = scmp.eq.s32.totalorder %s21, 1
    %p123 = por %p121, %p122
    %p124 = scmp.ne.s32.totalorder %s115, %s116
    %p125 = scmp.eq.s32.totalorder %s21, 0
    %p126 = por %p124, %p125
    %p127 = scmp.ne.s32.totalorder %s115, %s116
    %p128 = scmp.eq.s32.totalorder %s22, 1
    %p129 = por %p127, %p128
    %p131 = scmp.ne.s32.totalorder %s116, %s130
    %p132 = scmp.eq.s32.totalorder %s22, 0
    %p133 = por %p131, %p132
    %s135 = sadd.s32 %s134, 1
    %p138 = scmp.eq.s32.totalorder %s16, 1
    %p139 = scmp.ne.s32.totalorder %s134, %s136
    %p140 = scmp.eq.s32.totalorder %s16, 0
    %p141 = por %p139, %p140
    %p142 = scmp.ne.s32.totalorder %s134, %s136
    %p143 = scmp.eq.s32.totalorder %s21, 1
    %p144 = por %p142, %p143
    %p145 = scmp.ne.s32.totalorder %s136, %s137
    %p146 = scmp.eq.s32.totalorder %s21, 0
    %p147 = por %p145, %p146
    %p148 = scmp.ne.s32.totalorder %s136, %s137
    %p149 = scmp.eq.s32.totalorder %s22, 1
    %p150 = por %p148, %p149
    %p152 = scmp.ne.s32.totalorder %s137, %s151
    %p153 = scmp.eq.s32.totalorder %s22, 0
    %p154 = por %p152, %p153
    %s156 = sadd.s32 %s155, 1
    %p159 = scmp.eq.s32.totalorder %s16, 1
    %p160 = scmp.ne.s32.totalorder %s155, %s157
    %p161 = scmp.eq.s32.totalorder %s16, 0
    %p162 = por %p160, %p161
    %p163 = scmp.ne.s32.totalorder %s155, %s157
    %p164 = scmp.eq.s32.totalorder %s21, 1
    %p165 = por %p163, %p164
    %p166 = scmp.ne.s32.totalorder %s157, %s158
    %p167 = scmp.eq.s32.totalorder %s21, 0
    %p168 = por %p166, %p167
    %p169 = scmp.ne.s32.totalorder %s157, %s158
    %p170 = scmp.eq.s32.totalorder %s22, 1
    %p171 = por %p169, %p170
    %p173 = scmp.ne.s32.totalorder %s158, %s172
    %p174 = scmp.eq.s32.totalorder %s22, 0
    %p175 = por %p173, %p174
    %s177 = sadd.s32 %s176, 1
    %p180 = scmp.eq.s32.totalorder %s16, 1
    %p181 = scmp.ne.s32.totalorder %s176, %s178
    %p182 = scmp.eq.s32.totalorder %s16, 0
    %p183 = por %p181, %p182
    %p184 = scmp.ne.s32.totalorder %s176, %s178
    %p185 = scmp.eq.s32.totalorder %s21, 1
    %p186 = por %p184, %p185
    %p187 = scmp.ne.s32.totalorder %s178, %s179
    %p188 = scmp.eq.s32.totalorder %s21, 0
    %p189 = por %p187, %p188
    %p190 = scmp.ne.s32.totalorder %s178, %s179
    %p191 = scmp.eq.s32.totalorder %s22, 1
    %p192 = por %p190, %p191
    %p194 = scmp.ne.s32.totalorder %s179, %s193
    %p195 = scmp.eq.s32.totalorder %s22, 0
    %p196 = por %p194, %p195
    %s197 = ssub.s32 %s16, %s23
    %p198 = scmp.eq.s32.totalorder %s197, 0
    %s200 = sadd.s32 %s199, 1
    %s201 = scalar_select %p198, %s199, %s200
    %p204 = pneg %p198
    %p205 = scmp.eq.s32.totalorder %s16, 1
    %p206 = por %p204, %p205
    %p207 = scmp.ne.s32.totalorder %s199, %s202
    %p208 = scmp.eq.s32.totalorder %s16, 0
    %p209 = por %p207, %p208
    %p210 = scmp.ne.s32.totalorder %s199, %s202
    %p211 = scmp.eq.s32.totalorder %s21, 1
    %p212 = por %p210, %p211
    %p213 = scmp.ne.s32.totalorder %s202, %s203
    %p214 = scmp.eq.s32.totalorder %s21, 0
    %p215 = por %p213, %p214
    %p216 = scmp.ne.s32.totalorder %s202, %s203
    %p217 = scmp.eq.s32.totalorder %s22, 1
    %p218 = por %p216, %p217
    %p220 = scmp.ne.s32.totalorder %s203, %s219
    %p221 = scmp.eq.s32.totalorder %s22, 0
    %p222 = por %p220, %p221
    %p223 = scmp.le.s32.totalorder 1, %s16
    %p224 = scmp.lt.s32.totalorder %s16, 3
    %p225 = pnand %p223, %p224
    %p226 = pneg %p225
    // Predicated region
    $region9: #{discriminator_forward.7} parent=5 // pred_check
      _
    $region10: #{discriminator_forward.7} parent=5 // pred_check_branch
      %228 = sbr.rel (%p225) target = $region12
    $region11: #{discriminator_forward.7} parent=5 // pred_region
      %s229 = ssub.s32 %s16, 1
      // Predicated region
      $region13: #{discriminator_forward.7} parent=11 // pred_check
        %p230 = pneg %p63
      $region14: #{discriminator_forward.7} parent=11 // pred_check_branch
        %232 = sbr.rel (%p230) target = $region16
      $region15: #{discriminator_forward.7} parent=11 // pred_region
        _
      $region16: #{discriminator_forward.7} parent=11 // pred_fallthru
        _
      // Predicated region
      $region17: #{discriminator_forward.7} parent=11 // pred_check
        %p233 = pneg %p84
      $region18: #{discriminator_forward.7} parent=11 // pred_check_branch
        %235 = sbr.rel (%p233) target = $region20
      $region19: #{discriminator_forward.7} parent=11 // pred_region
        _
      $region20: #{discriminator_forward.7} parent=11 // pred_fallthru
        _
      // Predicated region
      $region21: #{discriminator_forward.7} parent=11 // pred_check
        %p236 = pneg %p105
      $region22: #{discriminator_forward.7} parent=11 // pred_check_branch
        %238 = sbr.rel (%p236) target = $region24
      $region23: #{discriminator_forward.7} parent=11 // pred_region
        _
      $region24: #{discriminator_forward.7} parent=11 // pred_fallthru
        _
      // Predicated region
      $region25: #{discriminator_forward.7} parent=11 // pred_check
        %p239 = pneg %p126
      $region26: #{discriminator_forward.7} parent=11 // pred_check_branch
        %241 = sbr.rel (%p239) target = $region28
      $region27: #{discriminator_forward.7} parent=11 // pred_region
        _
      $region28: #{discriminator_forward.7} parent=11 // pred_fallthru
        _
      // Predicated region
      $region29: #{discriminator_forward.7} parent=11 // pred_check
        %p242 = pneg %p147
      $region30: #{discriminator_forward.7} parent=11 // pred_check_branch
        %244 = sbr.rel (%p242) target = $region32
      $region31: #{discriminator_forward.7} parent=11 // pred_region
        _
      $region32: #{discriminator_forward.7} parent=11 // pred_fallthru
        _
      // Predicated region
      $region33: #{discriminator_forward.7} parent=11 // pred_check
        %p245 = pneg %p168
      $region34: #{discriminator_forward.7} parent=11 // pred_check_branch
        %247 = sbr.rel (%p245) target = $region36
      $region35: #{discriminator_forward.7} parent=11 // pred_region
        _
      $region36: #{discriminator_forward.7} parent=11 // pred_fallthru
        _
      // Predicated region
      $region37: #{discriminator_forward.7} parent=11 // pred_check
        %p248 = pneg %p189
      $region38: #{discriminator_forward.7} parent=11 // pred_check_branch
        %250 = sbr.rel (%p248) target = $region40
      $region39: #{discriminator_forward.7} parent=11 // pred_region
        _
      $region40: #{discriminator_forward.7} parent=11 // pred_fallthru
        _
    $region12: #{discriminator_forward.7} parent=5 // pred_fallthru
      _
    %p251 = scmp.lt.s32.totalorder %s16, 2
    // Predicated region
    $region41: #{discriminator_forward.7} parent=5 // pred_check
      %p252 = pneg %p251
    $region42: #{discriminator_forward.7} parent=5 // pred_check_branch
      %254 = sbr.rel (%p252) target = $region44
    $region43: #{discriminator_forward.7} parent=5 // pred_region
      // Predicated region
      $region45: #{discriminator_forward.7} parent=43 // pred_check
        %p255 = pneg %p36
      $region46: #{discriminator_forward.7} parent=43 // pred_check_branch
        %257 = sbr.rel (%p255) target = $region48
      $region47: #{discriminator_forward.7} parent=43 // pred_region
        %p258 = scmp.lt.s32.totalorder %s16, 1
        %s259 = scalar_select %p258, %s16, 1
        %s260 = smul.addr %s259, 2
        %s261 = smul.addr %s260, 4
        %s262 = scalar_lea.vmem %s0, %s261
      $region48: #{discriminator_forward.7} parent=43 // pred_fallthru
        _
    $region44: #{discriminator_forward.7} parent=5 // pred_fallthru
      _
    %p263 = scmp.le.s32.totalorder 1, %s16
    %p264 = scmp.lt.s32.totalorder %s16, 3
    %p265 = pnand %p263, %p264
    %p266 = pneg %p265
    // Predicated region
    $region49: #{discriminator_forward.7} parent=5 // pred_check
      _
    $region50: #{discriminator_forward.7} parent=5 // pred_check_branch
      %268 = sbr.rel (%p265) target = $region52
    $region51: #{discriminator_forward.7} parent=5 // pred_region
      %s269 = ssub.s32 %s16, 1
      %p270 = scmp.lt.s32.totalorder %s21, 1
      %s271 = scalar_select %p270, %s21, 1
      %s272 = smul.addr %s271, 2
      %s273 = smul.addr %s272, 4
      %s274 = scalar_lea.vmem %s0, %s273
      %p275 = pneg %p42
      %p276 = pneg %p39
      %p277 = pneg %p63
      %p278 = pneg %p60
      %p279 = pneg %p84
      %p280 = pneg %p81
      %p281 = pneg %p105
      %p282 = pneg %p102
      %p283 = pneg %p126
      %p284 = pneg %p123
      %p285 = pneg %p147
      %p286 = pneg %p144
      %p287 = pneg %p168
      %p288 = pneg %p165
      %p289 = pneg %p189
      %p290 = pneg %p186
      %p291 = pneg %p215
      %p292 = pneg %p212
      %p293 = scmp.lt.s32.totalorder %s21, 1
      %s294 = scalar_select %p293, %s21, 1
      %s295 = smul.addr %s294, 2
      %s296 = smul.addr %s295, 4
      %s297 = scalar_lea.vmem %s8, %s296
      %p298 = scmp.lt.s32.totalorder %s21, 1
      %s299 = scalar_select %p298, %s21, 1
      %s300 = smul.addr %s299, 2
      %s301 = smul.addr %s300, 4
      %s302 = scalar_lea.vmem %s0, %s301
      %p303 = scmp.lt.s32.totalorder %s21, 1
      %s304 = scalar_select %p303, %s21, 1
      %s305 = smul.addr %s304, 2
      %s306 = smul.addr %s305, 4
      %s307 = scalar_lea.vmem %s8, %s306
      %v309 = vld [vmem:[%s302] sm:$0xf]
      %v310 = vld [vmem:[%s302 + $0x4] sm:$0xf]
      %v311 = vld [vmem:[%s1] sm:$0xf]
      %v312 = vld [vmem:[%s1 + $0x4] sm:$0xf]
      %v313 = vld [vmem:[%s1 + $0x8] sm:$0xf]
      %v314 = vld [vmem:[%s1 + $0xc] sm:$0xf]
      %v315 = vld [vmem:[%s2] sm:$0x1]
      %v317 = vlaneseq
      %v318 = vshrl.u32 %v317, 7
      %v319 = vsub.s32 0, %v318
      %v320 = vrot.slane %v315, %v319
      %v324 = vunpack.c.l.b16 %v309
      %v325 = vunpack.c.l.b16 %v310
      %v326 = vpack.c.b16 %v325, %v324
      %v331 = vunpack.c.l.b16 %v311
      %v332 = vunpack.c.l.b16 %v312
      %v333 = vunpack.c.l.b16 %v313
      %v334 = vunpack.c.l.b16 %v314
      %v335 = vpack.c.b16 %v332, %v331
      %v336 = vpack.c.b16 %v334, %v333
      %vm339 = vcmask 261120
      %v341 = vsel %vm339, %v326, 0
      %343 = vmatprep.subr.bf16.mxu0 0
      %344 = vmatpush1.bf16.msra.mxu0 0
      %345 = vmatprep.subr.bf16.mxu0 0
      %346 = vmatpush1.bf16.msra.mxu0 0
      %347 = vmatprep.subr.bf16.mxu0 0
      %348 = vmatpush1.bf16.msra.mxu0 0
      %349 = vmatprep.subr.bf16.mxu0 0
      %350 = vmatpush1.bf16.msra.mxu0 0
      %351 = vmatprep.subr.bf16.mxu0 0
      %352 = vmatpush1.bf16.msra.mxu0 0
      %353 = vmatprep.subr.bf16.mxu0 0
      %354 = vmatpush1.bf16.msra.mxu0 0
      %355 = vmatprep.subr.bf16.mxu0 0
      %356 = vmatpush1.bf16.msra.mxu0 %v336
      %357 = vmatprep.subr.bf16.mxu0 0
      %358 = vmatpush1.bf16.msra.mxu0 %v335
      %359 = vmatprep.subr.bf16.mxu0 0
      %360 = vmatpush2.bf16.msra.mxu0 0
      %361 = vmatprep.subr.bf16.mxu0 0
      %362 = vmatpush2.bf16.msra.mxu0 0
      %363 = vmatprep.subr.bf16.mxu0 0
      %364 = vmatpush2.bf16.msra.mxu0 0
      %365 = vmatprep.subr.bf16.mxu0 0
      %366 = vmatpush2.bf16.msra.mxu0 0
      %367 = vmatprep.subr.bf16.mxu0 0
      %368 = vmatpush2.bf16.msra.mxu0 0
      %369 = vmatprep.subr.bf16.mxu0 0
      %370 = vmatpush2.bf16.msra.mxu0 0
      %371 = vmatprep.subr.bf16.mxu0 0
      %372 = vmatpush2.bf16.msra.mxu0 0
      %373 = vmatprep.subr.bf16.mxu0 0
      %374 = vmatpush2.bf16.msra.mxu0 0
      %375 = vmatprep.mubr.bf16.mxu0 0
      %376 = vmatmul.mubr.bf16.gmra.mxu0 %v341
      %v377 = vpop.f32.mrf.mxu0
      %v378 = vadd.f32 %v320, %v377
      %v379 = vpop.f32.mrf.mxu0
      %v380 = vpop.f32.mrf.mxu0
      %v381 = vadd.f32 %v320, %v380
      %v382 = vpop.f32.mrf.mxu0
      %383 = vdwg.mxu0
      %v384 = vld [vmem:[%s3] sm:$0xf]
      %v385 = vld [vmem:[%s3 + $0x4] sm:$0xf]
      %v386 = vld [vmem:[%s3 + $0x8] sm:$0xf]
      %v387 = vld [vmem:[%s3 + $0xc] sm:$0xf]
      %v388 = vld [vmem:[%s4] sm:$0x1]
      %v390 = vlaneseq
      %v391 = vshrl.u32 %v390, 7
      %v392 = vsub.s32 0, %v391
      %v393 = vrot.slane %v388, %v392
      %v399 = vunpack.c.l.b16 %v384
      %v400 = vunpack.c.l.b16 %v385
      %v401 = vunpack.c.l.b16 %v386
      %v402 = vunpack.c.l.b16 %v387
      %v403 = vpack.c.b16 %v400, %v399
      %v404 = vpack.c.b16 %v402, %v401
      %407 = vmatprep.subr.bf16.mxu0 0
      %408 = vmatpush1.bf16.msra.mxu0 0
      %409 = vmatprep.subr.bf16.mxu0 0
      %410 = vmatpush1.bf16.msra.mxu0 0
      %411 = vmatprep.subr.bf16.mxu0 0
      %412 = vmatpush1.bf16.msra.mxu0 0
      %413 = vmatprep.subr.bf16.mxu0 0
      %414 = vmatpush1.bf16.msra.mxu0 0
      %415 = vmatprep.subr.bf16.mxu0 0
      %416 = vmatpush1.bf16.msra.mxu0 0
      %417 = vmatprep.subr.bf16.mxu0 0
      %418 = vmatpush1.bf16.msra.mxu0 0
      %419 = vmatprep.subr.bf16.mxu0 0
      %420 = vmatpush1.bf16.msra.mxu0 %v404
      %421 = vmatprep.subr.bf16.mxu0 0
      %422 = vmatpush1.bf16.msra.mxu0 %v403
      %423 = vmatprep.subr.bf16.mxu0 0
      %424 = vmatpush2.bf16.msra.mxu0 0
      %425 = vmatprep.subr.bf16.mxu0 0
      %426 = vmatpush2.bf16.msra.mxu0 0
      %427 = vmatprep.subr.bf16.mxu0 0
      %428 = vmatpush2.bf16.msra.mxu0 0
      %429 = vmatprep.subr.bf16.mxu0 0
      %430 = vmatpush2.bf16.msra.mxu0 0
      %431 = vmatprep.subr.bf16.mxu0 0
      %432 = vmatpush2.bf16.msra.mxu0 0
      %433 = vmatprep.subr.bf16.mxu0 0
      %434 = vmatpush2.bf16.msra.mxu0 0
      %435 = vmatprep.subr.bf16.mxu0 0
      %436 = vmatpush2.bf16.msra.mxu0 0
      %437 = vmatprep.subr.bf16.mxu0 0
      %438 = vmatpush2.bf16.msra.mxu0 0
      %439 = vmatprep.mubr.bf16.mxu0 0
      %440 = vmatmul.mubr.bf16.gmra.mxu0 %v341
      %v441 = vpop.f32.mrf.mxu0
      %v442 = vadd.f32 %v393, %v441
      %v443 = vpop.f32.mrf.mxu0
      %v444 = vpop.f32.mrf.mxu0
      %v445 = vadd.f32 %v393, %v444
      %v446 = vpop.f32.mrf.mxu0
      %447 = vdwg.mxu0
      %v448 = vld [vmem:[%s5] sm:$0xf]
      %v449 = vld [vmem:[%s5 + $0x4] sm:$0xf]
      %v450 = vld [vmem:[%s5 + $0x8] sm:$0xf]
      %v451 = vld [vmem:[%s5 + $0xc] sm:$0xf]
      %v452 = vld [vmem:[%s6] sm:$0x1]
      %v454 = vlaneseq
      %v455 = vshrl.u32 %v454, 7
      %v456 = vsub.s32 0, %v455
      %v457 = vrot.slane %v452, %v456
      %v463 = vunpack.c.l.b16 %v448
      %v464 = vunpack.c.l.b16 %v449
      %v465 = vunpack.c.l.b16 %v450
      %v466 = vunpack.c.l.b16 %v451
      %v467 = vpack.c.b16 %v464, %v463
      %v468 = vpack.c.b16 %v466, %v465
      %471 = vmatprep.subr.bf16.mxu0 0
      %472 = vmatpush1.bf16.msra.mxu0 0
      %473 = vmatprep.subr.bf16.mxu0 0
      %474 = vmatpush1.bf16.msra.mxu0 0
      %475 = vmatprep.subr.bf16.mxu0 0
      %476 = vmatpush1.bf16.msra.mxu0 0
      %477 = vmatprep.subr.bf16.mxu0 0
      %478 = vmatpush1.bf16.msra.mxu0 0
      %479 = vmatprep.subr.bf16.mxu0 0
      %480 = vmatpush1.bf16.msra.mxu0 0
      %481 = vmatprep.subr.bf16.mxu0 0
      %482 = vmatpush1.bf16.msra.mxu0 0
      %483 = vmatprep.subr.bf16.mxu0 0
      %484 = vmatpush1.bf16.msra.mxu0 %v468
      %485 = vmatprep.subr.bf16.mxu0 0
      %486 = vmatpush1.bf16.msra.mxu0 %v467
      %487 = vmatprep.subr.bf16.mxu0 0
      %488 = vmatpush2.bf16.msra.mxu0 0
      %489 = vmatprep.subr.bf16.mxu0 0
      %490 = vmatpush2.bf16.msra.mxu0 0
      %491 = vmatprep.subr.bf16.mxu0 0
      %492 = vmatpush2.bf16.msra.mxu0 0
      %493 = vmatprep.subr.bf16.mxu0 0
      %494 = vmatpush2.bf16.msra.mxu0 0
      %495 = vmatprep.subr.bf16.mxu0 0
      %496 = vmatpush2.bf16.msra.mxu0 0
      %497 = vmatprep.subr.bf16.mxu0 0
      %498 = vmatpush2.bf16.msra.mxu0 0
      %499 = vmatprep.subr.bf16.mxu0 0
      %500 = vmatpush2.bf16.msra.mxu0 0
      %501 = vmatprep.subr.bf16.mxu0 0
      %502 = vmatpush2.bf16.msra.mxu0 0
      %503 = vmatprep.mubr.bf16.mxu0 0
      %504 = vmatmul.mubr.bf16.gmra.mxu0 %v341
      %v505 = vpop.f32.mrf.mxu0
      %v506 = vadd.f32 %v457, %v505
      %v507 = vpop.f32.mrf.mxu0
      %v508 = vpop.f32.mrf.mxu0
      %v509 = vadd.f32 %v457, %v508
      %v510 = vpop.f32.mrf.mxu0
      %511 = vdwg.mxu0
      %v512 = vpack.c.bf16 %v381, %v378
      %v513 = vpack.c.bf16 %v445, %v442
      %vm514 = vcmask 31744
      %v516 = vsel %vm514, %v512, 0
      %v519 = vsel %vm514, %v513, 0
      %521 = vmatprep.subr.bf16.mxu0 0
      %522 = vmatpush1.bf16.xpose.msra.mxu0 0
      %523 = vmatprep.subr.bf16.mxu0 0
      %524 = vmatpush1.bf16.xpose.msra.mxu0 0
      %525 = vmatprep.subr.bf16.mxu0 0
      %526 = vmatpush1.bf16.xpose.msra.mxu0 0
      %527 = vmatprep.subr.bf16.mxu0 0
      %528 = vmatpush1.bf16.xpose.msra.mxu0 0
      %529 = vmatprep.subr.bf16.mxu0 0
      %530 = vmatpush1.bf16.xpose.msra.mxu0 0
      %531 = vmatprep.subr.bf16.mxu0 0
      %532 = vmatpush1.bf16.xpose.msra.mxu0 0
      %533 = vmatprep.subr.bf16.mxu0 0
      %534 = vmatpush1.bf16.xpose.msra.mxu0 0
      %535 = vmatprep.subr.bf16.mxu0 0
      %536 = vmatpush1.bf16.xpose.msra.mxu0 %v519
      %537 = vmatprep.subr.bf16.mxu0 0
      %538 = vmatpush2.bf16.xpose.msra.mxu0 0
      %539 = vmatprep.subr.bf16.mxu0 0
      %540 = vmatpush2.bf16.xpose.msra.mxu0 0
      %541 = vmatprep.subr.bf16.mxu0 0
      %542 = vmatpush2.bf16.xpose.msra.mxu0 0
      %543 = vmatprep.subr.bf16.mxu0 0
      %544 = vmatpush2.bf16.xpose.msra.mxu0 0
      %545 = vmatprep.subr.bf16.mxu0 0
      %546 = vmatpush2.bf16.xpose.msra.mxu0 0
      %547 = vmatprep.subr.bf16.mxu0 0
      %548 = vmatpush2.bf16.xpose.msra.mxu0 0
      %549 = vmatprep.subr.bf16.mxu0 0
      %550 = vmatpush2.bf16.xpose.msra.mxu0 0
      %551 = vmatprep.subr.bf16.mxu0 0
      %552 = vmatpush2.bf16.xpose.msra.mxu0 0
      %553 = vmatprep.mubr.bf16.mxu0 0
      %554 = vmatmul.mubr.bf16.gmra.mxu0 %v516
      %v555 = vpop.f32.mrf.mxu0
      %v556 = vadd.f32 0.0, %v555
      %v557 = vpop.f32.mrf.mxu0
      %v558 = vpop.f32.mrf.mxu0
      %v559 = vadd.f32 0.0, %v558
      %v560 = vpop.f32.mrf.mxu0
      %561 = vdwg.mxu0
      %vm562 = vcmask 130048
      %v563 = vsel %vm562, %v556, -inf
      %564 = vmax.xlane.f32.xlu0 %v563
      %v565 = vpop.xlane.xlu0 %564
      %v566 = vsel %vm562, %v559, -inf
      %567 = vmax.xlane.f32.xlu0 %v566
      %v568 = vpop.xlane.xlu0 %567
      %v569 = vsub.f32 %v556, %v565
      %v570 = vsub.f32 %v559, %v568
      %v571 = vmul.f32 %v569, 1.442695
      %v572 = vpow.pop %v571
      %v573 = vmul.f32 %v570, 1.442695
      %v574 = vpow.pop %v573
      %v575 = vsel %vm562, %v572, 0.0
      %576 = vadd.xlane.f32.xlu0 %v575
      %v577 = vpop.xlane.xlu0 %576
      %v578 = vsel %vm562, %v574, 0.0
      %579 = vadd.xlane.f32.xlu0 %v578
      %v580 = vpop.xlane.xlu0 %579
      %v581 = vrcp.pop %v577
      %v582 = vrcp.pop %v580
      %v583 = vmul.f32 %v572, %v581
      %v584 = vmul.f32 %v574, %v582
      %v585 = vpack.c.bf16 %v584, %v583
      %v586 = vpack.c.bf16 %v509, %v506
      %v588 = vsel %vm562, %v585, 0
      %590 = vmatprep.subr.bf16.mxu0 0
      %591 = vmatpush1.bf16.msra.mxu0 0
      %592 = vmatprep.subr.bf16.mxu0 0
      %593 = vmatpush1.bf16.msra.mxu0 0
      %594 = vmatprep.subr.bf16.mxu0 0
      %595 = vmatpush1.bf16.msra.mxu0 0
      %596 = vmatprep.subr.bf16.mxu0 0
      %597 = vmatpush1.bf16.msra.mxu0 0
      %598 = vmatprep.subr.bf16.mxu0 0
      %599 = vmatpush1.bf16.msra.mxu0 0
      %600 = vmatprep.subr.bf16.mxu0 0
      %601 = vmatpush1.bf16.msra.mxu0 0
      %602 = vmatprep.subr.bf16.mxu0 0
      %603 = vmatpush1.bf16.msra.mxu0 0
      %604 = vmatprep.subr.bf16.mxu0 0
      %605 = vmatpush1.bf16.msra.mxu0 %v586
      %606 = vmatprep.subr.bf16.mxu0 0
      %607 = vmatpush2.bf16.msra.mxu0 0
      %608 = vmatprep.subr.bf16.mxu0 0
      %609 = vmatpush2.bf16.msra.mxu0 0
      %610 = vmatprep.subr.bf16.mxu0 0
      %611 = vmatpush2.bf16.msra.mxu0 0
      %612 = vmatprep.subr.bf16.mxu0 0
      %613 = vmatpush2.bf16.msra.mxu0 0
      %614 = vmatprep.subr.bf16.mxu0 0
      %615 = vmatpush2.bf16.msra.mxu0 0
      %616 = vmatprep.subr.bf16.mxu0 0
      %617 = vmatpush2.bf16.msra.mxu0 0
      %618 = vmatprep.subr.bf16.mxu0 0
      %619 = vmatpush2.bf16.msra.mxu0 0
      %620 = vmatprep.subr.bf16.mxu0 0
      %621 = vmatpush2.bf16.msra.mxu0 0
      %622 = vmatprep.mubr.bf16.mxu0 0
      %623 = vmatmul.mubr.bf16.gmra.mxu0 %v588
      %v624 = vpop.f32.mrf.mxu0
      %v625 = vadd.f32 0.0, %v624
      %v626 = vpop.f32.mrf.mxu0
      %v627 = vpop.f32.mrf.mxu0
      %v628 = vadd.f32 0.0, %v627
      %v629 = vpop.f32.mrf.mxu0
      %630 = vdwg.mxu0
      %v631 = vld [vmem:[#allocation2] sm:$0x1]
      %s632 = vtos %v631
      %v633 = vstv %s632
      %v634 = vmul.f32 %v633, %v625
      %v635 = vmul.f32 %v633, %v628
      %v636 = vunpack.c.l.bf16 %v309
      %v637 = vunpack.c.l.bf16 %v310
      %v638 = vadd.f32 %v634, %v636
      %v639 = vadd.f32 %v635, %v637
      %v640 = vpack.c.bf16 %v639, %v638
      %v642 = vunpack.c.l.b16 %v640
      %v643 = vunpack.c.h.b16 %v640
      %v644 = vpack.c.b16 %v642, %v642
      %v645 = vpack.c.b16 %v643, %v643
      %vm648 = vcmask 257024
      %649 = vst.msk [vmem:[%s307] sm:$0xf] %vm648, %v644
      %650 = vst.msk [vmem:[%s307 + $0x4] sm:$0xf] %vm648, %v645
      %p651 = scmp.lt.s32.totalorder %s21, 1
      %s652 = scalar_select %p651, %s21, 1
      %s653 = smul.addr %s652, 2
      %s654 = smul.addr %s653, 4
      %s655 = scalar_lea.vmem %s8, %s654
      // Predicated region
      $region53: #{discriminator_forward.7} parent=51 // pred_check
        %p656 = pneg %p212
      $region54: #{discriminator_forward.7} parent=51 // pred_check_branch
        %658 = sbr.rel (%p656) target = $region56
      $region55: #{discriminator_forward.7} parent=51 // pred_region
        _
      $region56: #{discriminator_forward.7} parent=51 // pred_fallthru
        _
    $region52: #{discriminator_forward.7} parent=5 // pred_fallthru
      _
    %p659 = scmp.le.s32.totalorder 2, %s16
    // Predicated region
    $region57: #{discriminator_forward.7} parent=5 // pred_check
      %p660 = pneg %p659
    $region58: #{discriminator_forward.7} parent=5 // pred_check_branch
      %662 = sbr.rel (%p660) target = $region60
    $region59: #{discriminator_forward.7} parent=5 // pred_region
      %s663 = ssub.s32 %s16, 2
      // Predicated region
      $region61: #{discriminator_forward.7} parent=59 // pred_check
        %p664 = pneg %p218
      $region62: #{discriminator_forward.7} parent=59 // pred_check_branch
        %666 = sbr.rel (%p664) target = $region64
      $region63: #{discriminator_forward.7} parent=59 // pred_region
        %p667 = scmp.lt.s32.totalorder %s22, 1
        %s668 = scalar_select %p667, %s22, 1
        %s669 = smul.addr %s668, 2
        %s670 = smul.addr %s669, 4
        %s671 = scalar_lea.vmem %s8, %s670
      $region64: #{discriminator_forward.7} parent=59 // pred_fallthru
        _
    $region60: #{discriminator_forward.7} parent=5 // pred_fallthru
      _
  $region6: #{discriminator_forward.7} parent=0 // loop_footer
    %s20 = sadd.s32 1, %s16
  $region7: #{discriminator_forward.7} parent=0 // loop_footer_branch
    %15 = sbr.rel target = $region3
  $region8: #{discriminator_forward.7} parent=0 // loop_exit
    _

</llo_original>
